<compile_context>
chip_gen: v7x
topology: tpu7x:2x2x1
jax: 0.10.0
libtpu: 0.0.40
codegen_flags: <defaults>
</compile_context>

<pallas_src>
import functools

import numpy as np
import jax
import jax.numpy as jnp
from jax.experimental import pallas as pl
from jax.experimental.pallas import tpu as pltpu

SCALE_EPS = 1e-8   # pDic['scale_epsilon']
BIG = 1e30         # additive mask for padded window rows


def _round_up(a, b):
    return (a + b - 1) // b * b


def shapelet_model_kernel(shp_ref, x_ref, bands_ref, band1_ref, pw_ref, w_ref,
                          b_ref, out_ref, feats_ref, *, plan, L, Q, JP, eps):
    """One batch tile (lanes = batch).

    shp_ref   : SMEM (2K,)           flattened [sum(s^2)_k, sum(s)_k] pairs
    x_ref     : VMEM (M, Q, TILE)    time on sublanes, batch on lanes
    bands_ref : VMEM (CU, RS, Q)     per-channel stacked shapelet band matrices
    band1_ref : VMEM (CU, R1, Q)     per-channel stacked ones band matrices
    pw_ref    : VMEM (K, JP, 1)      positional weights (already / L), pad rows = 1
    w_ref     : VMEM (nClass, K)     linear3 weight
    b_ref     : VMEM (nClass, 1)     linear3 bias
    out_ref   : VMEM (nClass, TILE)  lane-dense logits for this batch tile
    feats_ref : VMEM (K, TILE)       scratch: per-shapelet min-pooled features
    """
    rows = jax.lax.broadcasted_iota(jnp.int32, (JP, 1), 0)

    # TODO(synk): for very large K, convert the fully-unrolled member loops
    # into a lax.fori_loop over an SMEM index table to bound live ranges.
    for ci, (m, need_mean, dil_groups) in enumerate(plan):
        xc = x_ref[m]                                     # (Q, TILE)
        xsq = xc * xc
        # MXU: every shapelet cross-correlation on this channel in one matmul.
        P = jnp.dot(bands_ref[ci], xc, preferred_element_type=jnp.float32)
        # MXU: per-dilation window sums of x^2 (and of x when a mean is needed).
        S2 = jnp.dot(band1_ref[ci], xsq, preferred_element_type=jnp.float32)
        S1 = (jnp.dot(band1_ref[ci], xc, preferred_element_type=jnp.float32)
              if need_mean else None)

        for dil, g_slot, st_groups in dil_groups:
            J = Q - (L - 1) * dil
            maskv = jnp.where(rows < J, 0.0, BIG)         # (JP, 1) pad-row mask
            w2 = S2[g_slot * JP:(g_slot + 1) * JP, :]     # sum_l x[j+l*d]^2
            mean = central2 = None
            if any(st in (1, 2) for st, _ in st_groups):
                wsum = S1[g_slot * JP:(g_slot + 1) * JP, :]
                mean = wsum * (1.0 / L)
                central2 = w2 - wsum * mean               # sum_l (w_l - mean)^2

            for st, members in st_groups:
                inv_den = None
                if st == 0:
                    A = w2 + maskv
                elif st == 1:
                    A = central2 + maskv
                else:  # st == 2: z-normalized windows
                    c2p = jnp.maximum(central2, 0.0)      # guard fp cancellation
                    denom = jnp.sqrt(c2p * (1.0 / (L - 1))) + eps  # unbiased std+eps
                    r = pl.reciprocal(denom, approx=True)          # EUP slot
                    inv_den = r * (2.0 - denom * r)                # 1 Newton step
                    zsq = c2p * inv_den * inv_den                  # sum_l z_l^2
                    A = zsq + maskv

                for k, s_slot in members:
                    c = P[s_slot * JP:(s_slot + 1) * JP, :]        # sum_l s_l x
                    s2k = shp_ref[2 * k]                           # sum_l s_l^2
                    ssk = shp_ref[2 * k + 1]                       # sum_l s_l
                    if st == 0:
                        u = c
                    else:
                        u = c - ssk * mean
                        if st == 2:
                            u = u * inv_den
                    dist = jnp.maximum(s2k + A - 2.0 * u, 0.0)     # (JP, TILE)
                    ftr = dist * pw_ref[k]                         # pw folds 1/L
                    feat = jnp.maximum(jnp.min(ftr, axis=0, keepdims=True), 0.0)
                    feats_ref[pl.ds(k, 1), :] = feat

    # TODO(synk): F.dropout(p=pDic['dropoutPreY']) is stochastic; eval identity.
    out_ref[...] = (jnp.dot(w_ref[...], feats_ref[...],
                            preferred_element_type=jnp.float32) + b_ref[...])


def learning_shapelets_forward(x, shapelets, pos_maps, pos_slopes, w, b,
                               configs, ep=0, lane_tile=1024):
    """JAX/Pallas equivalent of LearningShapeletsModel.forward(x, ep) (eval)."""
    del ep  # only toggles .detach() in the reference; forward values identical
    x = jnp.asarray(x, jnp.float32)
    I, M, Q = x.shape
    shapelets = jnp.asarray(shapelets, jnp.float32)
    K, L = shapelets.shape
    w = jnp.asarray(w, jnp.float32)                       # (nClass, K)
    nClass = w.shape[0]
    pos_maps = jnp.asarray(pos_maps, jnp.float32)
    pos_slopes = jnp.asarray(pos_slopes, jnp.float32).reshape(K)
    configs = tuple((int(m), int(d), int(st)) for m, d, st in configs)

    Js = [Q - (L - 1) * d for _, d, _ in configs]
    assert min(Js) >= 1 and pos_maps.shape[1] >= max(Js)
    JP = _round_up(max(Js), 8)                            # uniform, 8-aligned slab

    # ---- static plan: group shapelets by channel / dilation / scaleType ----
    channels = sorted({m for m, _, _ in configs})
    CU = len(channels)
    ch_slot = {m: i for i, m in enumerate(channels)}
    ch_shapelets = {m: [] for m in channels}
    ch_dils = {m: [] for m in channels}
    for k, (m, d, _) in enumerate(configs):
        ch_shapelets[m].append(k)
        if d not in ch_dils[m]:
            ch_dils[m].append(d)

    plan = []
    for m in channels:
        need_mean = any(configs[k][2] in (1, 2) for k in ch_shapelets[m])
        dil_groups = []
        for g_slot, d in enumerate(ch_dils[m]):
            st_map = {}
            for k in ch_shapelets[m]:
                if configs[k][1] == d:
                    st_map.setdefault(configs[k][2], []).append(
                        (k, ch_shapelets[m].index(k)))
            st_groups = tuple((st, tuple(mem)) for st, mem in sorted(st_map.items()))
            dil_groups.append((d, g_slot, st_groups))
        plan.append((m, need_mean, tuple(dil_groups)))
    plan = tuple(plan)

    RS = max(len(ch_shapelets[m]) for m in channels) * JP
    R1 = max(len(ch_dils[m]) for m in channels) * JP

    # ---- banded matrices for the MXU cross-correlation / window sums ----
    patterns = {}
    for d in sorted({d for _, d, _ in configs}):
        J = Q - (L - 1) * d
        E = np.zeros((L, JP, Q), np.float32)
        jj = np.arange(J)
        for l in range(L):
            E[l, jj, jj + l * d] = 1.0
        patterns[d] = E

    band1_np = np.zeros((CU, R1, Q), np.float32)
    for m in channels:
        for g_slot, d in enumerate(ch_dils[m]):
            band1_np[ch_slot[m], g_slot * JP:(g_slot + 1) * JP, :] = \
                patterns[d].sum(axis=0)
    band1 = jnp.asarray(band1_np)

    bands = jnp.zeros((CU, RS, Q), jnp.float32)
    for m in channels:
        for s_slot, k in enumerate(ch_shapelets[m]):
            d = configs[k][1]
            blk = jnp.tensordot(shapelets[k], jnp.asarray(patterns[d]), axes=1)
            bands = bands.at[ch_slot[m], s_slot * JP:(s_slot + 1) * JP, :].set(blk)

    # ---- per-shapelet scalars (flat 1-D SMEM) and positional weights ----
    s2 = jnp.sum(shapelets * shapelets, axis=1)
    ssum = jnp.sum(shapelets, axis=1)
    shp_flat = jnp.stack([s2, ssum], axis=1).reshape(-1)            # (2K,)

    pwall = (pos_slopes[:, None] * jax.nn.elu(-pos_maps) + 2.0) / float(L)
    pw3 = jnp.ones((K, JP, 1), jnp.float32)                         # pad rows = 1
    for k, (_, d, _) in enumerate(configs):
        Jk = Q - (L - 1) * d
        pw3 = pw3.at[k, :Jk, 0].set(pwall[k, :Jk])
    b_col = jnp.asarray(b, jnp.float32).reshape(nClass, 1)

    # ---- lane-dense layout: (I, M, Q) -> (M, Q, I); batch on the lane axis ----
    # TODO(synk): this transpose is one extra HBM round-trip of x; feed x in
    # (M, Q, I) layout upstream to remove it from the hot path.
    xt = jnp.transpose(x, (1, 2, 0))

    # ---- batch tile: 128-aligned, >=2 grid steps when I > 128 (v7x megacore),
    #      sized from a VMEM budget that includes in-kernel temporaries ----
    per_lane_bytes = 4 * (2 * M * Q + RS + 2 * R1 + 12 * JP + 2 * K + 4 * nClass)
    budget = 24 << 20
    cap = max(128, budget // per_lane_bytes // 128 * 128)
    tile = min(cap, max(128, lane_tile // 128 * 128), _round_up(I, 128))
    if I > 128:
        tile = min(tile, _round_up(pl.cdiv(I, 2), 128))
    tile = max(tile, 128)
    n_tiles = pl.cdiv(I, tile)
    i_pad = n_tiles * tile
    if i_pad != I:
        xt = jnp.pad(xt, ((0, 0), (0, 0), (0, i_pad - I)))

    fixed_bytes = 4 * (CU * RS * Q + CU * R1 * Q + K * JP * 128
                       + nClass * _round_up(K, 128) + nClass * 128)
    vmem_limit = 2 * fixed_bytes + 2 * tile * per_lane_bytes + (16 << 20)
    vmem_limit = int(max(32 << 20, min(vmem_limit, 64 << 20)))

    kernel = functools.partial(shapelet_model_kernel, plan=plan, L=L, Q=Q,
                               JP=JP, eps=SCALE_EPS)

    out_t = pl.pallas_call(
        kernel,
        out_shape=jax.ShapeDtypeStruct((nClass, i_pad), jnp.float32),
        grid=(n_tiles,),
        in_specs=[
            pl.BlockSpec(memory_space=pltpu.MemorySpace.SMEM),    # shapelet scalars
            pl.BlockSpec((M, Q, tile), lambda i: (0, 0, i)),      # x batch tile
            pl.BlockSpec((CU, RS, Q), lambda i: (0, 0, 0)),       # shapelet bands
            pl.BlockSpec((CU, R1, Q), lambda i: (0, 0, 0)),       # ones bands
            pl.BlockSpec((K, JP, 1), lambda i: (0, 0, 0)),        # position weights
            pl.BlockSpec((nClass, K), lambda i: (0, 0)),          # linear3 weight
            pl.BlockSpec((nClass, 1), lambda i: (0, 0)),          # linear3 bias
        ],
        out_specs=pl.BlockSpec((nClass, tile), lambda i: (0, i)),
        scratch_shapes=[pltpu.VMEM((K, tile), jnp.float32)],
        compiler_params=pltpu.CompilerParams(
            dimension_semantics=("parallel",),
            vmem_limit_bytes=vmem_limit),
    )(shp_flat, xt, bands, band1, pw3, w, b_col)

    return out_t.T[:I]                                            # (I, nClass)


def reference_forward(x, shapelets, pos_maps, pos_slopes, w, b, configs, eps):
    """Plain-JAX transcription of the PyTorch forward (unfold/normalize path)."""
    I, M, Q = x.shape
    K, L = shapelets.shape
    feats = []
    for k, (m, dil, st) in enumerate(configs):
        J = Q - (L - 1) * dil
        xc = x[:, m, :]
        wins = jnp.stack([xc[:, l * dil:l * dil + J] for l in range(L)], axis=-1)
        if st == 2:
            mean = wins.mean(axis=-1, keepdims=True)
            std = jnp.std(wins, axis=-1, keepdims=True, ddof=1)   # torch.std: unbiased
            z = (wins - mean) / (std + eps)
        elif st == 1:
            z = wins - wins.mean(axis=-1, keepdims=True)
        else:
            z = wins
        raw = jnp.mean((shapelets[k].reshape(1, 1, L) - z) ** 2, axis=-1)     # (I, J)
        pw = pos_slopes[k] * jax.nn.elu(-pos_maps[k, :J]) + 2.0
        feats.append(jnp.maximum(jnp.min(raw * pw[None, :], axis=1), 0.0))
    y = jnp.maximum(jnp.stack(feats, axis=1), 0.0)
    # eval-mode dropout is identity
    return y @ w.T + b


if __name__ == "__main__":
    # Small deterministic problem consistent with the module's shapes.
    I, M, Q = 4, 3, 32          # batch, channels, series length
    L = 8                       # shapelet length (a chosen Lcand)
    K = 6                       # number of discovered shapelets
    nClass = 3
    # Per-shapelet static metadata (channel m, dilation, scaleType) -- normally
    # produced by discoverShapelets; synthesized deterministically here.
    configs = ((0, 1, 2), (1, 2, 0), (2, 1, 1), (0, 1, 2), (1, 2, 1), (2, 1, 0))
    Jmax = max(Q - (L - 1) * d for _, d, _ in configs)

    key = jax.random.PRNGKey(0)
    kx, ks, kp, kw, kb, kx2 = jax.random.split(key, 6)

    x = jax.random.normal(kx, (I, M, Q), jnp.float32)
    shapelets = jax.random.normal(ks, (K, L), jnp.float32)        # FeatureBlock.shapelet
    pos_maps = 0.2 * jax.random.normal(kp, (K, Jmax), jnp.float32)
    pos_slopes = jnp.ones((K,), jnp.float32)                      # FeatureBlock.posSlope
    bound = 1.0 / (K ** 0.5)                                      # nn.Linear default init
    w = jax.random.uniform(kw, (nClass, K), jnp.float32, -bound, bound)
    b = jax.random.uniform(kb, (nClass,), jnp.float32, -bound, bound)

    # --- tiny batch (single 128-lane tile) ---
    out = jax.block_until_ready(
        learning_shapelets_forward(x, shapelets, pos_maps, pos_slopes, w, b,
                                   configs, ep=0))
    ref = reference_forward(x, shapelets, pos_maps, pos_slopes, w, b, configs,
                            SCALE_EPS)
    assert out.shape == (I, nClass), out.shape
    assert jnp.allclose(out, ref, rtol=1e-4, atol=1e-4), (out, ref)

    # --- larger batch exercising the tiled/padded multi-step 'parallel' grid ---
    I2 = 300
    x2 = jax.random.normal(kx2, (I2, M, Q), jnp.float32)
    out2 = jax.block_until_ready(
        learning_shapelets_forward(x2, shapelets, pos_maps, pos_slopes, w, b,
                                   configs, ep=3))
    ref2 = reference_forward(x2, shapelets, pos_maps, pos_slopes, w, b, configs,
                             SCALE_EPS)
    assert out2.shape == (I2, nClass), out2.shape
    assert jnp.allclose(out2, ref2, rtol=1e-4, atol=1e-4), \
        float(jnp.max(jnp.abs(out2 - ref2)))

    print("KERNEL_OK")
</pallas_src>

<mosaic_0001>
module attributes {stable_mosaic.version = 11 : i64} {
  func.func @shapelet_model_kernel(%arg0: i32, %arg1: memref<12xf32, #tpu.memory_space<smem>>, %arg2: memref<3x32x128xf32, #tpu.memory_space<vmem>>, %arg3: memref<3x64x32xf32, #tpu.memory_space<vmem>>, %arg4: memref<3x32x32xf32, #tpu.memory_space<vmem>>, %arg5: memref<6x32x1xf32, #tpu.memory_space<vmem>>, %arg6: memref<3x6xf32, #tpu.memory_space<vmem>>, %arg7: memref<3x1xf32, #tpu.memory_space<vmem>>, %arg8: memref<3x128xf32, #tpu.memory_space<vmem>>, %arg9: memref<6x128xf32, #tpu.memory_space<vmem>>) attributes {dimension_semantics = [#tpu.dimension_semantics<parallel>], iteration_bounds = array<i64: 1>, scalar_prefetch = 0 : i64, scratch_operands = 1 : i64, tpu.core_type = #tpu.core_type<tc>, window_params = [{transform_indices = @transform_0, window_bounds = array<i64: 12>}, {transform_indices = @transform_1, window_bounds = array<i64: 3, 32, 128>}, {pipeline_mode = #tpu.pipeline_mode<synchronous>, transform_indices = @transform_2, window_bounds = array<i64: 3, 64, 32>}, {pipeline_mode = #tpu.pipeline_mode<synchronous>, transform_indices = @transform_3, window_bounds = array<i64: 3, 32, 32>}, {pipeline_mode = #tpu.pipeline_mode<synchronous>, transform_indices = @transform_4, window_bounds = array<i64: 6, 32, 1>}, {pipeline_mode = #tpu.pipeline_mode<synchronous>, transform_indices = @transform_5, window_bounds = array<i64: 3, 6>}, {pipeline_mode = #tpu.pipeline_mode<synchronous>, transform_indices = @transform_6, window_bounds = array<i64: 3, 1>}, {transform_indices = @transform_7, window_bounds = array<i64: 3, 128>}]} {
    %0 = tpu.iota {dimensions = array<i32: 0>} : vector<32x1xi32>
    %c0 = arith.constant 0 : index
    %c0_0 = arith.constant 0 : index
    %c0_1 = arith.constant 0 : index
    %1 = vector.load %arg2[%c0, %c0_0, %c0_1] : memref<3x32x128xf32, #tpu.memory_space<vmem>>, vector<1x32x128xf32>
    %2 = vector.shape_cast %1 : vector<1x32x128xf32> to vector<32x128xf32>
    %3 = arith.mulf %2, %2 : vector<32x128xf32>
    %c0_2 = arith.constant 0 : index
    %c0_3 = arith.constant 0 : index
    %c0_4 = arith.constant 0 : index
    %4 = vector.load %arg3[%c0_2, %c0_3, %c0_4] : memref<3x64x32xf32, #tpu.memory_space<vmem>>, vector<1x64x32xf32>
    %5 = vector.shape_cast %4 : vector<1x64x32xf32> to vector<64x32xf32>
    %cst = arith.constant dense<0.000000e+00> : vector<64x128xf32>
    %6 = tpu.matmul %5, %2, %cst {dimension_numbers = #tpu.dot_dimension_numbers<[1], [0], [0], [1], [0, 0, 1, 1], [], []>} : vector<64x32xf32>, vector<32x128xf32>, vector<64x128xf32> -> vector<64x128xf32>
    %c0_5 = arith.constant 0 : index
    %c0_6 = arith.constant 0 : index
    %c0_7 = arith.constant 0 : index
    %7 = vector.load %arg4[%c0_5, %c0_6, %c0_7] : memref<3x32x32xf32, #tpu.memory_space<vmem>>, vector<1x32x32xf32>
    %8 = vector.shape_cast %7 : vector<1x32x32xf32> to vector<32x32xf32>
    %cst_8 = arith.constant dense<0.000000e+00> : vector<32x128xf32>
    %9 = tpu.matmul %8, %3, %cst_8 {dimension_numbers = #tpu.dot_dimension_numbers<[1], [0], [0], [1], [0, 0, 1, 1], [], []>} : vector<32x32xf32>, vector<32x128xf32>, vector<32x128xf32> -> vector<32x128xf32>
    %c0_9 = arith.constant 0 : index
    %c0_10 = arith.constant 0 : index
    %c0_11 = arith.constant 0 : index
    %10 = vector.load %arg4[%c0_9, %c0_10, %c0_11] : memref<3x32x32xf32, #tpu.memory_space<vmem>>, vector<1x32x32xf32>
    %11 = vector.shape_cast %10 : vector<1x32x32xf32> to vector<32x32xf32>
    %cst_12 = arith.constant dense<0.000000e+00> : vector<32x128xf32>
    %12 = tpu.matmul %11, %2, %cst_12 {dimension_numbers = #tpu.dot_dimension_numbers<[1], [0], [0], [1], [0, 0, 1, 1], [], []>} : vector<32x32xf32>, vector<32x128xf32>, vector<32x128xf32> -> vector<32x128xf32>
    %c25_i32 = arith.constant 25 : i32
    %13 = vector.broadcast %c25_i32 : i32 to vector<32x1xi32>
    %14 = arith.cmpi slt, %0, %13 : vector<32x1xi32>
    %cst_13 = arith.constant 0.000000e+00 : f32
    %cst_14 = arith.constant 1.000000e+30 : f32
    %15 = vector.broadcast %cst_13 : f32 to vector<32x1xf32>
    %16 = vector.broadcast %cst_14 : f32 to vector<32x1xf32>
    %17 = arith.select %14, %15, %16 : vector<32x1xi1>, vector<32x1xf32>
    %cst_15 = arith.constant 1.250000e-01 : f32
    %18 = vector.broadcast %cst_15 : f32 to vector<32x128xf32>
    %19 = arith.mulf %12, %18 : vector<32x128xf32>
    %20 = arith.mulf %12, %19 : vector<32x128xf32>
    %21 = arith.subf %9, %20 : vector<32x128xf32>
    %cst_16 = arith.constant 0.000000e+00 : f32
    %22 = vector.broadcast %cst_16 : f32 to vector<32x128xf32>
    %23 = arith.maximumf %21, %22 : vector<32x128xf32>
    %cst_17 = arith.constant 0.142857149 : f32
    %24 = vector.broadcast %cst_17 : f32 to vector<32x128xf32>
    %25 = arith.mulf %23, %24 : vector<32x128xf32>
    %26 = math.sqrt %25 : vector<32x128xf32>
    %cst_18 = arith.constant 9.99999993E-9 : f32
    %27 = vector.broadcast %cst_18 : f32 to vector<32x128xf32>
    %28 = arith.addf %26, %27 : vector<32x128xf32>
    %29 = tpu.reciprocal %28 {approx = true} : vector<32x128xf32> -> vector<32x128xf32>
    %30 = arith.mulf %28, %29 : vector<32x128xf32>
    %cst_19 = arith.constant 2.000000e+00 : f32
    %31 = vector.broadcast %cst_19 : f32 to vector<32x128xf32>
    %32 = arith.subf %31, %30 : vector<32x128xf32>
    %33 = arith.mulf %29, %32 : vector<32x128xf32>
    %34 = arith.mulf %23, %33 : vector<32x128xf32>
    %35 = arith.mulf %34, %33 : vector<32x128xf32>
    %36 = vector.broadcast %17 : vector<32x1xf32> to vector<32x128xf32>
    %37 = arith.addf %35, %36 : vector<32x128xf32>
    %38 = vector.extract_strided_slice %6 {offsets = [0, 0], sizes = [32, 128], strides = [1, 1]} : vector<64x128xf32> to vector<32x128xf32>
    %c0_20 = arith.constant 0 : index
    %39 = memref.load %arg1[%c0_20] : memref<12xf32, #tpu.memory_space<smem>>
    %c1 = arith.constant 1 : index
    %40 = memref.load %arg1[%c1] : memref<12xf32, #tpu.memory_space<smem>>
    %41 = vector.broadcast %40 : f32 to vector<32x128xf32>
    %42 = arith.mulf %41, %19 : vector<32x128xf32>
    %43 = arith.subf %38, %42 : vector<32x128xf32>
    %44 = arith.mulf %43, %33 : vector<32x128xf32>
    %45 = vector.broadcast %39 : f32 to vector<32x128xf32>
    %46 = arith.addf %45, %37 : vector<32x128xf32>
    %cst_21 = arith.constant 2.000000e+00 : f32
    %47 = vector.broadcast %cst_21 : f32 to vector<32x128xf32>
    %48 = arith.mulf %47, %44 : vector<32x128xf32>
    %49 = arith.subf %46, %48 : vector<32x128xf32>
    %cst_22 = arith.constant 0.000000e+00 : f32
    %50 = vector.broadcast %cst_22 : f32 to vector<32x128xf32>
    %51 = arith.maximumf %49, %50 : vector<32x128xf32>
    %c0_23 = arith.constant 0 : index
    %c0_24 = arith.constant 0 : index
    %c0_25 = arith.constant 0 : index
    %52 = vector.load %arg5[%c0_23, %c0_24, %c0_25] : memref<6x32x1xf32, #tpu.memory_space<vmem>>, vector<1x32x1xf32>
    %53 = vector.shape_cast %52 : vector<1x32x1xf32> to vector<32x1xf32>
    %54 = vector.broadcast %53 : vector<32x1xf32> to vector<32x128xf32>
    %55 = arith.mulf %51, %54 : vector<32x128xf32>
    %cst_26 = arith.constant dense<0x7F800000> : vector<128xf32>
    %56 = vector.multi_reduction <minimumf>, %55, %cst_26 [0] : vector<32x128xf32> to vector<128xf32>
    %57 = vector.shape_cast %56 : vector<128xf32> to vector<1x128xf32>
    %cst_27 = arith.constant 0.000000e+00 : f32
    %58 = vector.broadcast %cst_27 : f32 to vector<1x128xf32>
    %59 = arith.maximumf %57, %58 : vector<1x128xf32>
    %c0_28 = arith.constant 0 : index
    %c0_29 = arith.constant 0 : index
    %60 = vector.load %arg9[%c0_28, %c0_29] : memref<6x128xf32, #tpu.memory_space<vmem>>, vector<1x128xf32>
    tpu.vector_store %arg9[%c0_28, %c0_29], %59 {strides = array<i32>} : memref<6x128xf32, #tpu.memory_space<vmem>>, vector<1x128xf32>,
    %61 = vector.extract_strided_slice %6 {offsets = [32, 0], sizes = [32, 128], strides = [1, 1]} : vector<64x128xf32> to vector<32x128xf32>
    %c6 = arith.constant 6 : index
    %62 = memref.load %arg1[%c6] : memref<12xf32, #tpu.memory_space<smem>>
    %c7 = arith.constant 7 : index
    %63 = memref.load %arg1[%c7] : memref<12xf32, #tpu.memory_space<smem>>
    %64 = vector.broadcast %63 : f32 to vector<32x128xf32>
    %65 = arith.mulf %64, %19 : vector<32x128xf32>
    %66 = arith.subf %61, %65 : vector<32x128xf32>
    %67 = arith.mulf %66, %33 : vector<32x128xf32>
    %68 = vector.broadcast %62 : f32 to vector<32x128xf32>
    %69 = arith.addf %68, %37 : vector<32x128xf32>
    %cst_30 = arith.constant 2.000000e+00 : f32
    %70 = vector.broadcast %cst_30 : f32 to vector<32x128xf32>
    %71 = arith.mulf %70, %67 : vector<32x128xf32>
    %72 = arith.subf %69, %71 : vector<32x128xf32>
    %cst_31 = arith.constant 0.000000e+00 : f32
    %73 = vector.broadcast %cst_31 : f32 to vector<32x128xf32>
    %74 = arith.maximumf %72, %73 : vector<32x128xf32>
    %c3 = arith.constant 3 : index
    %c0_32 = arith.constant 0 : index
    %c0_33 = arith.constant 0 : index
    %75 = vector.load %arg5[%c3, %c0_32, %c0_33] : memref<6x32x1xf32, #tpu.memory_space<vmem>>, vector<1x32x1xf32>
    %76 = vector.shape_cast %75 : vector<1x32x1xf32> to vector<32x1xf32>
    %77 = vector.broadcast %76 : vector<32x1xf32> to vector<32x128xf32>
    %78 = arith.mulf %74, %77 : vector<32x128xf32>
    %cst_34 = arith.constant dense<0x7F800000> : vector<128xf32>
    %79 = vector.multi_reduction <minimumf>, %78, %cst_34 [0] : vector<32x128xf32> to vector<128xf32>
    %80 = vector.shape_cast %79 : vector<128xf32> to vector<1x128xf32>
    %cst_35 = arith.constant 0.000000e+00 : f32
    %81 = vector.broadcast %cst_35 : f32 to vector<1x128xf32>
    %82 = arith.maximumf %80, %81 : vector<1x128xf32>
    %c3_36 = arith.constant 3 : index
    %c0_37 = arith.constant 0 : index
    %83 = vector.load %arg9[%c3_36, %c0_37] : memref<6x128xf32, #tpu.memory_space<vmem>>, vector<1x128xf32>
    tpu.vector_store %arg9[%c3_36, %c0_37], %82 {strides = array<i32>} : memref<6x128xf32, #tpu.memory_space<vmem>>, vector<1x128xf32>,
    %c1_38 = arith.constant 1 : index
    %c0_39 = arith.constant 0 : index
    %c0_40 = arith.constant 0 : index
    %84 = vector.load %arg2[%c1_38, %c0_39, %c0_40] : memref<3x32x128xf32, #tpu.memory_space<vmem>>, vector<1x32x128xf32>
    %85 = vector.shape_cast %84 : vector<1x32x128xf32> to vector<32x128xf32>
    %86 = arith.mulf %85, %85 : vector<32x128xf32>
    %c1_41 = arith.constant 1 : index
    %c0_42 = arith.constant 0 : index
    %c0_43 = arith.constant 0 : index
    %87 = vector.load %arg3[%c1_41, %c0_42, %c0_43] : memref<3x64x32xf32, #tpu.memory_space<vmem>>, vector<1x64x32xf32>
    %88 = vector.shape_cast %87 : vector<1x64x32xf32> to vector<64x32xf32>
    %cst_44 = arith.constant dense<0.000000e+00> : vector<64x128xf32>
    %89 = tpu.matmul %88, %85, %cst_44 {dimension_numbers = #tpu.dot_dimension_numbers<[1], [0], [0], [1], [0, 0, 1, 1], [], []>} : vector<64x32xf32>, vector<32x128xf32>, vector<64x128xf32> -> vector<64x128xf32>
    %c1_45 = arith.constant 1 : index
    %c0_46 = arith.constant 0 : index
    %c0_47 = arith.constant 0 : index
    %90 = vector.load %arg4[%c1_45, %c0_46, %c0_47] : memref<3x32x32xf32, #tpu.memory_space<vmem>>, vector<1x32x32xf32>
    %91 = vector.shape_cast %90 : vector<1x32x32xf32> to vector<32x32xf32>
    %cst_48 = arith.constant dense<0.000000e+00> : vector<32x128xf32>
    %92 = tpu.matmul %91, %86, %cst_48 {dimension_numbers = #tpu.dot_dimension_numbers<[1], [0], [0], [1], [0, 0, 1, 1], [], []>} : vector<32x32xf32>, vector<32x128xf32>, vector<32x128xf32> -> vector<32x128xf32>
    %c1_49 = arith.constant 1 : index
    %c0_50 = arith.constant 0 : index
    %c0_51 = arith.constant 0 : index
    %93 = vector.load %arg4[%c1_49, %c0_50, %c0_51] : memref<3x32x32xf32, #tpu.memory_space<vmem>>, vector<1x32x32xf32>
    %94 = vector.shape_cast %93 : vector<1x32x32xf32> to vector<32x32xf32>
    %cst_52 = arith.constant dense<0.000000e+00> : vector<32x128xf32>
    %95 = tpu.matmul %94, %85, %cst_52 {dimension_numbers = #tpu.dot_dimension_numbers<[1], [0], [0], [1], [0, 0, 1, 1], [], []>} : vector<32x32xf32>, vector<32x128xf32>, vector<32x128xf32> -> vector<32x128xf32>
    %c18_i32 = arith.constant 18 : i32
    %96 = vector.broadcast %c18_i32 : i32 to vector<32x1xi32>
    %97 = arith.cmpi slt, %0, %96 : vector<32x1xi32>
    %cst_53 = arith.constant 0.000000e+00 : f32
    %cst_54 = arith.constant 1.000000e+30 : f32
    %98 = vector.broadcast %cst_53 : f32 to vector<32x1xf32>
    %99 = vector.broadcast %cst_54 : f32 to vector<32x1xf32>
    %100 = arith.select %97, %98, %99 : vector<32x1xi1>, vector<32x1xf32>
    %cst_55 = arith.constant 1.250000e-01 : f32
    %101 = vector.broadcast %cst_55 : f32 to vector<32x128xf32>
    %102 = arith.mulf %95, %101 : vector<32x128xf32>
    %103 = arith.mulf %95, %102 : vector<32x128xf32>
    %104 = arith.subf %92, %103 : vector<32x128xf32>
    %105 = vector.broadcast %100 : vector<32x1xf32> to vector<32x128xf32>
    %106 = arith.addf %92, %105 : vector<32x128xf32>
    %107 = vector.extract_strided_slice %89 {offsets = [0, 0], sizes = [32, 128], strides = [1, 1]} : vector<64x128xf32> to vector<32x128xf32>
    %c2 = arith.constant 2 : index
    %108 = memref.load %arg1[%c2] : memref<12xf32, #tpu.memory_space<smem>>
    %109 = vector.broadcast %108 : f32 to vector<32x128xf32>
    %110 = arith.addf %109, %106 : vector<32x128xf32>
    %cst_56 = arith.constant 2.000000e+00 : f32
    %111 = vector.broadcast %cst_56 : f32 to vector<32x128xf32>
    %112 = arith.mulf %111, %107 : vector<32x128xf32>
    %113 = arith.subf %110, %112 : vector<32x128xf32>
    %cst_57 = arith.constant 0.000000e+00 : f32
    %114 = vector.broadcast %cst_57 : f32 to vector<32x128xf32>
    %115 = arith.maximumf %113, %114 : vector<32x128xf32>
    %c1_58 = arith.constant 1 : index
    %c0_59 = arith.constant 0 : index
    %c0_60 = arith.constant 0 : index
    %116 = vector.load %arg5[%c1_58, %c0_59, %c0_60] : memref<6x32x1xf32, #tpu.memory_space<vmem>>, vector<1x32x1xf32>
    %117 = vector.shape_cast %116 : vector<1x32x1xf32> to vector<32x1xf32>
    %118 = vector.broadcast %117 : vector<32x1xf32> to vector<32x128xf32>
    %119 = arith.mulf %115, %118 : vector<32x128xf32>
    %cst_61 = arith.constant dense<0x7F800000> : vector<128xf32>
    %120 = vector.multi_reduction <minimumf>, %119, %cst_61 [0] : vector<32x128xf32> to vector<128xf32>
    %121 = vector.shape_cast %120 : vector<128xf32> to vector<1x128xf32>
    %cst_62 = arith.constant 0.000000e+00 : f32
    %122 = vector.broadcast %cst_62 : f32 to vector<1x128xf32>
    %123 = arith.maximumf %121, %122 : vector<1x128xf32>
    %c1_63 = arith.constant 1 : index
    %c0_64 = arith.constant 0 : index
    %124 = vector.load %arg9[%c1_63, %c0_64] : memref<6x128xf32, #tpu.memory_space<vmem>>, vector<1x128xf32>
    tpu.vector_store %arg9[%c1_63, %c0_64], %123 {strides = array<i32>} : memref<6x128xf32, #tpu.memory_space<vmem>>, vector<1x128xf32>,
    %125 = vector.broadcast %100 : vector<32x1xf32> to vector<32x128xf32>
    %126 = arith.addf %104, %125 : vector<32x128xf32>
    %127 = vector.extract_strided_slice %89 {offsets = [32, 0], sizes = [32, 128], strides = [1, 1]} : vector<64x128xf32> to vector<32x128xf32>
    %c8 = arith.constant 8 : index
    %128 = memref.load %arg1[%c8] : memref<12xf32, #tpu.memory_space<smem>>
    %c9 = arith.constant 9 : index
    %129 = memref.load %arg1[%c9] : memref<12xf32, #tpu.memory_space<smem>>
    %130 = vector.broadcast %129 : f32 to vector<32x128xf32>
    %131 = arith.mulf %130, %102 : vector<32x128xf32>
    %132 = arith.subf %127, %131 : vector<32x128xf32>
    %133 = vector.broadcast %128 : f32 to vector<32x128xf32>
    %134 = arith.addf %133, %126 : vector<32x128xf32>
    %cst_65 = arith.constant 2.000000e+00 : f32
    %135 = vector.broadcast %cst_65 : f32 to vector<32x128xf32>
    %136 = arith.mulf %135, %132 : vector<32x128xf32>
    %137 = arith.subf %134, %136 : vector<32x128xf32>
    %cst_66 = arith.constant 0.000000e+00 : f32
    %138 = vector.broadcast %cst_66 : f32 to vector<32x128xf32>
    %139 = arith.maximumf %137, %138 : vector<32x128xf32>
    %c4 = arith.constant 4 : index
    %c0_67 = arith.constant 0 : index
    %c0_68 = arith.constant 0 : index
    %140 = vector.load %arg5[%c4, %c0_67, %c0_68] : memref<6x32x1xf32, #tpu.memory_space<vmem>>, vector<1x32x1xf32>
    %141 = vector.shape_cast %140 : vector<1x32x1xf32> to vector<32x1xf32>
    %142 = vector.broadcast %141 : vector<32x1xf32> to vector<32x128xf32>
    %143 = arith.mulf %139, %142 : vector<32x128xf32>
    %cst_69 = arith.constant dense<0x7F800000> : vector<128xf32>
    %144 = vector.multi_reduction <minimumf>, %143, %cst_69 [0] : vector<32x128xf32> to vector<128xf32>
    %145 = vector.shape_cast %144 : vector<128xf32> to vector<1x128xf32>
    %cst_70 = arith.constant 0.000000e+00 : f32
    %146 = vector.broadcast %cst_70 : f32 to vector<1x128xf32>
    %147 = arith.maximumf %145, %146 : vector<1x128xf32>
    %c4_71 = arith.constant 4 : index
    %c0_72 = arith.constant 0 : index
    %148 = vector.load %arg9[%c4_71, %c0_72] : memref<6x128xf32, #tpu.memory_space<vmem>>, vector<1x128xf32>
    tpu.vector_store %arg9[%c4_71, %c0_72], %147 {strides = array<i32>} : memref<6x128xf32, #tpu.memory_space<vmem>>, vector<1x128xf32>,
    %c2_73 = arith.constant 2 : index
    %c0_74 = arith.constant 0 : index
    %c0_75 = arith.constant 0 : index
    %149 = vector.load %arg2[%c2_73, %c0_74, %c0_75] : memref<3x32x128xf32, #tpu.memory_space<vmem>>, vector<1x32x128xf32>
    %150 = vector.shape_cast %149 : vector<1x32x128xf32> to vector<32x128xf32>
    %151 = arith.mulf %150, %150 : vector<32x128xf32>
    %c2_76 = arith.constant 2 : index
    %c0_77 = arith.constant 0 : index
    %c0_78 = arith.constant 0 : index
    %152 = vector.load %arg3[%c2_76, %c0_77, %c0_78] : memref<3x64x32xf32, #tpu.memory_space<vmem>>, vector<1x64x32xf32>
    %153 = vector.shape_cast %152 : vector<1x64x32xf32> to vector<64x32xf32>
    %cst_79 = arith.constant dense<0.000000e+00> : vector<64x128xf32>
    %154 = tpu.matmul %153, %150, %cst_79 {dimension_numbers = #tpu.dot_dimension_numbers<[1], [0], [0], [1], [0, 0, 1, 1], [], []>} : vector<64x32xf32>, vector<32x128xf32>, vector<64x128xf32> -> vector<64x128xf32>
    %c2_80 = arith.constant 2 : index
    %c0_81 = arith.constant 0 : index
    %c0_82 = arith.constant 0 : index
    %155 = vector.load %arg4[%c2_80, %c0_81, %c0_82] : memref<3x32x32xf32, #tpu.memory_space<vmem>>, vector<1x32x32xf32>
    %156 = vector.shape_cast %155 : vector<1x32x32xf32> to vector<32x32xf32>
    %cst_83 = arith.constant dense<0.000000e+00> : vector<32x128xf32>
    %157 = tpu.matmul %156, %151, %cst_83 {dimension_numbers = #tpu.dot_dimension_numbers<[1], [0], [0], [1], [0, 0, 1, 1], [], []>} : vector<32x32xf32>, vector<32x128xf32>, vector<32x128xf32> -> vector<32x128xf32>
    %c2_84 = arith.constant 2 : index
    %c0_85 = arith.constant 0 : index
    %c0_86 = arith.constant 0 : index
    %158 = vector.load %arg4[%c2_84, %c0_85, %c0_86] : memref<3x32x32xf32, #tpu.memory_space<vmem>>, vector<1x32x32xf32>
    %159 = vector.shape_cast %158 : vector<1x32x32xf32> to vector<32x32xf32>
    %cst_87 = arith.constant dense<0.000000e+00> : vector<32x128xf32>
    %160 = tpu.matmul %159, %150, %cst_87 {dimension_numbers = #tpu.dot_dimension_numbers<[1], [0], [0], [1], [0, 0, 1, 1], [], []>} : vector<32x32xf32>, vector<32x128xf32>, vector<32x128xf32> -> vector<32x128xf32>
    %c25_i32_88 = arith.constant 25 : i32
    %161 = vector.broadcast %c25_i32_88 : i32 to vector<32x1xi32>
    %162 = arith.cmpi slt, %0, %161 : vector<32x1xi32>
    %cst_89 = arith.constant 0.000000e+00 : f32
    %cst_90 = arith.constant 1.000000e+30 : f32
    %163 = vector.broadcast %cst_89 : f32 to vector<32x1xf32>
    %164 = vector.broadcast %cst_90 : f32 to vector<32x1xf32>
    %165 = arith.select %162, %163, %164 : vector<32x1xi1>, vector<32x1xf32>
    %cst_91 = arith.constant 1.250000e-01 : f32
    %166 = vector.broadcast %cst_91 : f32 to vector<32x128xf32>
    %167 = arith.mulf %160, %166 : vector<32x128xf32>
    %168 = arith.mulf %160, %167 : vector<32x128xf32>
    %169 = arith.subf %157, %168 : vector<32x128xf32>
    %170 = vector.broadcast %165 : vector<32x1xf32> to vector<32x128xf32>
    %171 = arith.addf %157, %170 : vector<32x128xf32>
    %172 = vector.extract_strided_slice %154 {offsets = [32, 0], sizes = [32, 128], strides = [1, 1]} : vector<64x128xf32> to vector<32x128xf32>
    %c10 = arith.constant 10 : index
    %173 = memref.load %arg1[%c10] : memref<12xf32, #tpu.memory_space<smem>>
    %174 = vector.broadcast %173 : f32 to vector<32x128xf32>
    %175 = arith.addf %174, %171 : vector<32x128xf32>
    %cst_92 = arith.constant 2.000000e+00 : f32
    %176 = vector.broadcast %cst_92 : f32 to vector<32x128xf32>
    %177 = arith.mulf %176, %172 : vector<32x128xf32>
    %178 = arith.subf %175, %177 : vector<32x128xf32>
    %cst_93 = arith.constant 0.000000e+00 : f32
    %179 = vector.broadcast %cst_93 : f32 to vector<32x128xf32>
    %180 = arith.maximumf %178, %179 : vector<32x128xf32>
    %c5 = arith.constant 5 : index
    %c0_94 = arith.constant 0 : index
    %c0_95 = arith.constant 0 : index
    %181 = vector.load %arg5[%c5, %c0_94, %c0_95] : memref<6x32x1xf32, #tpu.memory_space<vmem>>, vector<1x32x1xf32>
    %182 = vector.shape_cast %181 : vector<1x32x1xf32> to vector<32x1xf32>
    %183 = vector.broadcast %182 : vector<32x1xf32> to vector<32x128xf32>
    %184 = arith.mulf %180, %183 : vector<32x128xf32>
    %cst_96 = arith.constant dense<0x7F800000> : vector<128xf32>
    %185 = vector.multi_reduction <minimumf>, %184, %cst_96 [0] : vector<32x128xf32> to vector<128xf32>
    %186 = vector.shape_cast %185 : vector<128xf32> to vector<1x128xf32>
    %cst_97 = arith.constant 0.000000e+00 : f32
    %187 = vector.broadcast %cst_97 : f32 to vector<1x128xf32>
    %188 = arith.maximumf %186, %187 : vector<1x128xf32>
    %c5_98 = arith.constant 5 : index
    %c0_99 = arith.constant 0 : index
    %189 = vector.load %arg9[%c5_98, %c0_99] : memref<6x128xf32, #tpu.memory_space<vmem>>, vector<1x128xf32>
    tpu.vector_store %arg9[%c5_98, %c0_99], %188 {strides = array<i32>} : memref<6x128xf32, #tpu.memory_space<vmem>>, vector<1x128xf32>,
    %190 = vector.broadcast %165 : vector<32x1xf32> to vector<32x128xf32>
    %191 = arith.addf %169, %190 : vector<32x128xf32>
    %192 = vector.extract_strided_slice %154 {offsets = [0, 0], sizes = [32, 128], strides = [1, 1]} : vector<64x128xf32> to vector<32x128xf32>
    %c4_100 = arith.constant 4 : index
    %193 = memref.load %arg1[%c4_100] : memref<12xf32, #tpu.memory_space<smem>>
    %c5_101 = arith.constant 5 : index
    %194 = memref.load %arg1[%c5_101] : memref<12xf32, #tpu.memory_space<smem>>
    %195 = vector.broadcast %194 : f32 to vector<32x128xf32>
    %196 = arith.mulf %195, %167 : vector<32x128xf32>
    %197 = arith.subf %192, %196 : vector<32x128xf32>
    %198 = vector.broadcast %193 : f32 to vector<32x128xf32>
    %199 = arith.addf %198, %191 : vector<32x128xf32>
    %cst_102 = arith.constant 2.000000e+00 : f32
    %200 = vector.broadcast %cst_102 : f32 to vector<32x128xf32>
    %201 = arith.mulf %200, %197 : vector<32x128xf32>
    %202 = arith.subf %199, %201 : vector<32x128xf32>
    %cst_103 = arith.constant 0.000000e+00 : f32
    %203 = vector.broadcast %cst_103 : f32 to vector<32x128xf32>
    %204 = arith.maximumf %202, %203 : vector<32x128xf32>
    %c2_104 = arith.constant 2 : index
    %c0_105 = arith.constant 0 : index
    %c0_106 = arith.constant 0 : index
    %205 = vector.load %arg5[%c2_104, %c0_105, %c0_106] : memref<6x32x1xf32, #tpu.memory_space<vmem>>, vector<1x32x1xf32>
    %206 = vector.shape_cast %205 : vector<1x32x1xf32> to vector<32x1xf32>
    %207 = vector.broadcast %206 : vector<32x1xf32> to vector<32x128xf32>
    %208 = arith.mulf %204, %207 : vector<32x128xf32>
    %cst_107 = arith.constant dense<0x7F800000> : vector<128xf32>
    %209 = vector.multi_reduction <minimumf>, %208, %cst_107 [0] : vector<32x128xf32> to vector<128xf32>
    %210 = vector.shape_cast %209 : vector<128xf32> to vector<1x128xf32>
    %cst_108 = arith.constant 0.000000e+00 : f32
    %211 = vector.broadcast %cst_108 : f32 to vector<1x128xf32>
    %212 = arith.maximumf %210, %211 : vector<1x128xf32>
    %c2_109 = arith.constant 2 : index
    %c0_110 = arith.constant 0 : index
    %213 = vector.load %arg9[%c2_109, %c0_110] : memref<6x128xf32, #tpu.memory_space<vmem>>, vector<1x128xf32>
    tpu.vector_store %arg9[%c2_109, %c0_110], %212 {strides = array<i32>} : memref<6x128xf32, #tpu.memory_space<vmem>>, vector<1x128xf32>,
    %c0_111 = arith.constant 0 : index
    %c0_112 = arith.constant 0 : index
    %214 = vector.load %arg6[%c0_111, %c0_112] : memref<3x6xf32, #tpu.memory_space<vmem>>, vector<3x6xf32>
    %c0_113 = arith.constant 0 : index
    %c0_114 = arith.constant 0 : index
    %215 = vector.load %arg9[%c0_113, %c0_114] : memref<6x128xf32, #tpu.memory_space<vmem>>, vector<6x128xf32>
    %cst_115 = arith.constant dense<0.000000e+00> : vector<3x128xf32>
    %216 = tpu.matmul %214, %215, %cst_115 {dimension_numbers = #tpu.dot_dimension_numbers<[1], [0], [0], [1], [0, 0, 1, 1], [], []>} : vector<3x6xf32>, vector<6x128xf32>, vector<3x128xf32> -> vector<3x128xf32>
    %c0_116 = arith.constant 0 : index
    %c0_117 = arith.constant 0 : index
    %217 = vector.load %arg7[%c0_116, %c0_117] : memref<3x1xf32, #tpu.memory_space<vmem>>, vector<3x1xf32>
    %218 = vector.broadcast %217 : vector<3x1xf32> to vector<3x128xf32>
    %219 = arith.addf %216, %218 : vector<3x128xf32>
    %c0_118 = arith.constant 0 : index
    %c0_119 = arith.constant 0 : index
    %220 = vector.load %arg8[%c0_118, %c0_119] : memref<3x128xf32, #tpu.memory_space<vmem>>, vector<3x128xf32>
    tpu.vector_store %arg8[%c0_118, %c0_119], %219 {strides = array<i32>} : memref<3x128xf32, #tpu.memory_space<vmem>>, vector<3x128xf32>,
    return
  }
  func.func @transform_0(%arg0: i32) -> i32 {
    %c0_i32 = arith.constant 0 : i32
    %c0_i32_0 = arith.constant 0 : i32
    return %c0_i32 : i32
  }
  func.func @transform_1(%arg0: i32) -> (i32, i32, i32) {
    %c0_i32 = arith.constant 0 : i32
    %c0_i32_0 = arith.constant 0 : i32
    %c0_i32_1 = arith.constant 0 : i32
    return %c0_i32, %c0_i32_0, %arg0 : i32, i32, i32
  }
  func.func @transform_2(%arg0: i32) -> (i32, i32, i32) {
    %c0_i32 = arith.constant 0 : i32
    %c0_i32_0 = arith.constant 0 : i32
    %c0_i32_1 = arith.constant 0 : i32
    %c0_i32_2 = arith.constant 0 : i32
    return %c0_i32, %c0_i32_0, %c0_i32_1 : i32, i32, i32
  }
  func.func @transform_3(%arg0: i32) -> (i32, i32, i32) {
    %c0_i32 = arith.constant 0 : i32
    %c0_i32_0 = arith.constant 0 : i32
    %c0_i32_1 = arith.constant 0 : i32
    %c0_i32_2 = arith.constant 0 : i32
    return %c0_i32, %c0_i32_0, %c0_i32_1 : i32, i32, i32
  }
  func.func @transform_4(%arg0: i32) -> (i32, i32, i32) {
    %c0_i32 = arith.constant 0 : i32
    %c0_i32_0 = arith.constant 0 : i32
    %c0_i32_1 = arith.constant 0 : i32
    %c0_i32_2 = arith.constant 0 : i32
    return %c0_i32, %c0_i32_0, %c0_i32_1 : i32, i32, i32
  }
  func.func @transform_5(%arg0: i32) -> (i32, i32) {
    %c0_i32 = arith.constant 0 : i32
    %c0_i32_0 = arith.constant 0 : i32
    %c0_i32_1 = arith.constant 0 : i32
    return %c0_i32, %c0_i32_0 : i32, i32
  }
  func.func @transform_6(%arg0: i32) -> (i32, i32) {
    %c0_i32 = arith.constant 0 : i32
    %c0_i32_0 = arith.constant 0 : i32
    %c0_i32_1 = arith.constant 0 : i32
    return %c0_i32, %c0_i32_0 : i32, i32
  }
  func.func @transform_7(%arg0: i32) -> (i32, i32) {
    %c0_i32 = arith.constant 0 : i32
    %c0_i32_0 = arith.constant 0 : i32
    return %c0_i32, %arg0 : i32, i32
  }
}

</mosaic_0001>

<llo_original>
// kernel: tpu_custom_call.1
$region0: #{tpu_custom_call.1}
  #allocation0 [shape = 'u32[]', space=smem, size = 0x4, offset = 0x4, fixed_abs, tag = 'smem constant byte address 0x4 - core index']
  #allocation1 [shape = 'u32[144,128]{1,0:T(1,128)}', space=vmem, size = 0x12000, scoped, tag = 'internal scratch']
  #allocation2 [shape = 'f32[6,128]{1,0:T(8,128)}', space=vmem, size = 0x1000, scoped, tag = 'scratch operand']
  %s0 = inlined_call_operand.vmem [shape: f32[12], index: 0, kind: input, shape index: {}]
  %s1 = inlined_call_operand.vmem [shape: f32[3,32,128], index: 1, kind: input, shape index: {}]
  %s2 = inlined_call_operand.vmem [shape: f32[3,64,32], index: 2, kind: input, shape index: {}]
  %s3 = inlined_call_operand.vmem [shape: f32[3,32,32], index: 3, kind: input, shape index: {}]
  %s4 = inlined_call_operand.vmem [shape: f32[6,32,1], index: 4, kind: input, shape index: {}]
  %s5 = inlined_call_operand.vmem [shape: f32[3,6], index: 5, kind: input, shape index: {}]
  %s6 = inlined_call_operand.vmem [shape: f32[3,1], index: 6, kind: input, shape index: {}]
  %s7 = inlined_call_operand.hbm [shape: f32[3,128], index: 7, kind: output, shape index: {}]
  %s8 = sld [smem:[#allocation0]]
  $region42: #{tpu_custom_call.1} parent=0
    _
  %s10 = ssub.s32 1, %s8
  %s11 = scalar_select 0, %s10, %s8
  $region1: #{tpu_custom_call.1} parent=0
    #allocation3 [shape = 'u8[512]{0}', space=smem, size = 0x200, scoped, tag = 'input window, operand 0, single buffered']
    #allocation4 [shape = 's32[1]{0}', space=sflag, size = 0x4, scoped, tag = 'scoped memory for tpu_custom_call.1']
    #allocation5 [shape = 's32[1]{0}', space=sflag, size = 0x4, scoped, tag = 'scoped memory for tpu_custom_call.1']
    #allocation6 [shape = 'u8[2048]{0}', space=vmem, size = 0x800, scoped, tag = 'output window, operand 0, single buffered']
    %12 = vsyncpa [#allocation5], 0
    %13 = vsyncpa [#allocation4], 0
    // Predicated region
    $region2: #{tpu_custom_call.1} parent=1 // pred_check
      _
    $region3: #{tpu_custom_call.1} parent=1 // pred_check_branch
      %15 = sbr.rel (0) target = $region5
    $region4: #{tpu_custom_call.1} parent=1 // pred_region
      %s17 = ssub.s32 16, 16
      %18 = vsyncadd [#allocation5], %s17
      %s20 = sshll.u32 %s0, 4
      %s21 = int_to_ptr.vmem [resolvable:$true] %s20
      %23 = dma.vmem_to_smem %s21, 16, [#allocation3], [#allocation5]
    $region5: #{tpu_custom_call.1} parent=1 // pred_fallthru
      _
    // Predicated region
    $region6: #{tpu_custom_call.1} parent=1 // pred_check
      _
    $region7: #{tpu_custom_call.1} parent=1 // pred_check_branch
      %25 = sbr.rel (0) target = $region9
    $region8: #{tpu_custom_call.1} parent=1 // pred_region
      _
    $region9: #{tpu_custom_call.1} parent=1 // pred_fallthru
      _
    // Predicated region
    $region10: #{tpu_custom_call.1} parent=1 // pred_check
      _
    $region11: #{tpu_custom_call.1} parent=1 // pred_check_branch
      %27 = sbr.rel (0) target = $region13
    $region12: #{tpu_custom_call.1} parent=1 // pred_region
      _
    $region13: #{tpu_custom_call.1} parent=1 // pred_fallthru
      _
    // Predicated region
    $region14: #{tpu_custom_call.1} parent=1 // pred_check
      _
    $region15: #{tpu_custom_call.1} parent=1 // pred_check_branch
      %29 = sbr.rel (0) target = $region17
    $region16: #{tpu_custom_call.1} parent=1 // pred_region
      _
    $region17: #{tpu_custom_call.1} parent=1 // pred_fallthru
      _
    // Predicated region
    $region18: #{tpu_custom_call.1} parent=1 // pred_check
      _
    $region19: #{tpu_custom_call.1} parent=1 // pred_check_branch
      %31 = sbr.rel (0) target = $region21
    $region20: #{tpu_custom_call.1} parent=1 // pred_region
      _
    $region21: #{tpu_custom_call.1} parent=1 // pred_fallthru
      _
    // Predicated region
    $region22: #{tpu_custom_call.1} parent=1 // pred_check
      _
    $region23: #{tpu_custom_call.1} parent=1 // pred_check_branch
      %33 = sbr.rel (0) target = $region25
    $region24: #{tpu_custom_call.1} parent=1 // pred_region
      _
    $region25: #{tpu_custom_call.1} parent=1 // pred_fallthru
      _
    // Predicated region
    $region26: #{tpu_custom_call.1} parent=1 // pred_check
      _
    $region27: #{tpu_custom_call.1} parent=1 // pred_check_branch
      %35 = sbr.rel (0) target = $region29
    $region28: #{tpu_custom_call.1} parent=1 // pred_region
      _
    $region29: #{tpu_custom_call.1} parent=1 // pred_fallthru
      _
    // Predicated region
    $region30: #{tpu_custom_call.1} parent=1 // pred_check
      _
    $region31: #{tpu_custom_call.1} parent=1 // pred_check_branch
      %37 = sbr.rel (0) target = $region33
    $region32: #{tpu_custom_call.1} parent=1 // pred_region
      %38 = dma.done [#allocation5], 16
    $region33: #{tpu_custom_call.1} parent=1 // pred_fallthru
      _
    %39 = sfence
    %v40 = vlaneseq
    %v41 = vshrl.u32 %v40, 7
    %v42 = vadd.s32 %v41, 8
    %v43 = vadd.s32 %v41, 16
    %v44 = vadd.s32 %v41, 24
    %v45 = vld [vmem:[%s1] sm:$0xff]
    %v46 = vld [vmem:[%s1 + $0x8] sm:$0xff]
    %v47 = vld [vmem:[%s1 + $0x10] sm:$0xff]
    %v48 = vld [vmem:[%s1 + $0x18] sm:$0xff]
    %v49 = vmul.f32 %v45, %v45
    %v50 = vmul.f32 %v46, %v46
    %v51 = vmul.f32 %v47, %v47
    %v52 = vmul.f32 %v48, %v48
    %v53 = vld [vmem:[%s2] sm:$0xff]
    %v54 = vld [vmem:[%s2 + $0x8] sm:$0xff]
    %v55 = vld [vmem:[%s2 + $0x10] sm:$0xff]
    %v56 = vld [vmem:[%s2 + $0x18] sm:$0xff]
    %v57 = vld [vmem:[%s2 + $0x20] sm:$0xff]
    %v58 = vld [vmem:[%s2 + $0x28] sm:$0xff]
    %v59 = vld [vmem:[%s2 + $0x30] sm:$0xff]
    %v60 = vld [vmem:[%s2 + $0x38] sm:$0xff]
    %vm61 = vcmask 261120
    %v63 = vsel %vm61, %v53, 0
    %v66 = vsel %vm61, %v54, 0
    %v69 = vsel %vm61, %v55, 0
    %v72 = vsel %vm61, %v56, 0
    %v75 = vsel %vm61, %v57, 0
    %v78 = vsel %vm61, %v58, 0
    %v81 = vsel %vm61, %v59, 0
    %v84 = vsel %vm61, %v60, 0
    %86 = vmatprep.subr.mxu0 0.0
    %87 = vmatpush1.msra.mxu0 %v45
    %88 = vmatprep.subr.mxu0 0.0
    %89 = vmatpush1.msra.mxu0 %v46
    %90 = vmatprep.subr.mxu0 0.0
    %91 = vmatpush1.msra.mxu0 %v47
    %92 = vmatprep.subr.mxu0 0.0
    %93 = vmatpush1.msra.mxu0 %v48
    %94 = vmatprep.subr.mxu0 0.0
    %95 = vmatpush1.msra.mxu0 0.0
    %96 = vmatprep.subr.mxu0 0.0
    %97 = vmatpush1.msra.mxu0 0.0
    %98 = vmatprep.subr.mxu0 0.0
    %99 = vmatpush1.msra.mxu0 0.0
    %100 = vmatprep.subr.mxu0 0.0
    %101 = vmatpush1.msra.mxu0 0.0
    %102 = vmatprep.subr.mxu0 0.0
    %103 = vmatpush1.msra.mxu0 0.0
    %104 = vmatprep.subr.mxu0 0.0
    %105 = vmatpush1.msra.mxu0 0.0
    %106 = vmatprep.subr.mxu0 0.0
    %107 = vmatpush1.msra.mxu0 0.0
    %108 = vmatprep.subr.mxu0 0.0
    %109 = vmatpush1.msra.mxu0 0.0
    %110 = vmatprep.subr.mxu0 0.0
    %111 = vmatpush1.msra.mxu0 0.0
    %112 = vmatprep.subr.mxu0 0.0
    %113 = vmatpush1.msra.mxu0 0.0
    %114 = vmatprep.subr.mxu0 0.0
    %115 = vmatpush1.msra.mxu0 0.0
    %116 = vmatprep.subr.mxu0 0.0
    %117 = vmatpush1.msra.mxu0 0.0
    %118 = vmatprep.subr.mxu0 0.0
    %119 = vmatpush1.msra.mxu0 0.0
    %120 = vmatprep.subr.mxu0 0.0
    %121 = vmatpush1.msra.mxu0 0.0
    %122 = vmatprep.subr.mxu0 0.0
    %123 = vmatpush1.msra.mxu0 0.0
    %124 = vmatprep.subr.mxu0 0.0
    %125 = vmatpush1.msra.mxu0 0.0
    %126 = vmatprep.subr.mxu0 0.0
    %127 = vmatpush1.msra.mxu0 0.0
    %128 = vmatprep.subr.mxu0 0.0
    %129 = vmatpush1.msra.mxu0 0.0
    %130 = vmatprep.subr.mxu0 0.0
    %131 = vmatpush1.msra.mxu0 0.0
    %132 = vmatprep.subr.mxu0 0.0
    %133 = vmatpush1.msra.mxu0 0.0
    %134 = vmatprep.subr.mxu0 0.0
    %135 = vmatpush1.msra.mxu0 0.0
    %136 = vmatprep.subr.mxu0 0.0
    %137 = vmatpush1.msra.mxu0 0.0
    %138 = vmatprep.subr.mxu0 0.0
    %139 = vmatpush1.msra.mxu0 0.0
    %140 = vmatprep.subr.mxu0 0.0
    %141 = vmatpush1.msra.mxu0 0.0
    %142 = vmatprep.subr.mxu0 0.0
    %143 = vmatpush1.msra.mxu0 0.0
    %144 = vmatprep.subr.mxu0 0.0
    %145 = vmatpush1.msra.mxu0 0.0
    %146 = vmatprep.subr.mxu0 0.0
    %147 = vmatpush1.msra.mxu0 0.0
    %148 = vmatprep.subr.mxu0 0.0
    %149 = vmatpush1.msra.mxu0 0.0
    %150 = vmatprep.mubr.f32.mxu0 0.0
    %151 = vmatmul.mubr.f32.gmra.mrb[0].mxu0 %v63
    %v152 = vpop.f32.mrb[0].mxu0
    %v153 = vadd.f32 0.0, %v152
    %v154 = vpop.f32.mrb[0].mxu0
    %155 = vmatprep.mubr.f32.mxu0 0.0
    %156 = vmatmul.mubr.f32.gmra.mrb[0].mxu0 %v66
    %v157 = vpop.f32.mrb[0].mxu0
    %v158 = vadd.f32 0.0, %v157
    %v159 = vpop.f32.mrb[0].mxu0
    %160 = vmatprep.mubr.f32.mxu0 0.0
    %161 = vmatmul.mubr.f32.gmra.mrb[0].mxu0 %v69
    %v162 = vpop.f32.mrb[0].mxu0
    %v163 = vadd.f32 0.0, %v162
    %v164 = vpop.f32.mrb[0].mxu0
    %165 = vmatprep.mubr.f32.mxu0 0.0
    %166 = vmatmul.mubr.f32.gmra.mrb[0].mxu0 %v72
    %v167 = vpop.f32.mrb[0].mxu0
    %v168 = vadd.f32 0.0, %v167
    %v169 = vpop.f32.mrb[0].mxu0
    %170 = vmatprep.mubr.f32.mxu0 0.0
    %171 = vmatmul.mubr.f32.gmra.mrb[0].mxu0 %v75
    %v172 = vpop.f32.mrb[0].mxu0
    %v173 = vadd.f32 0.0, %v172
    %v174 = vpop.f32.mrb[0].mxu0
    %175 = vmatprep.mubr.f32.mxu0 0.0
    %176 = vmatmul.mubr.f32.gmra.mrb[0].mxu0 %v78
    %v177 = vpop.f32.mrb[0].mxu0
    %v178 = vadd.f32 0.0, %v177
    %v179 = vpop.f32.mrb[0].mxu0
    %180 = vmatprep.mubr.f32.mxu0 0.0
    %181 = vmatmul.mubr.f32.gmra.mrb[0].mxu0 %v81
    %v182 = vpop.f32.mrb[0].mxu0
    %v183 = vadd.f32 0.0, %v182
    %v184 = vpop.f32.mrb[0].mxu0
    %185 = vmatprep.mubr.f32.mxu0 0.0
    %186 = vmatmul.mubr.f32.gmra.mrb[0].mxu0 %v84
    %v187 = vpop.f32.mrb[0].mxu0
    %v188 = vadd.f32 0.0, %v187
    %v189 = vpop.f32.mrb[0].mxu0
    %190 = vdwg.mxu0
    %v191 = vld [vmem:[%s3] sm:$0xff]
    %v192 = vld [vmem:[%s3 + $0x8] sm:$0xff]
    %v193 = vld [vmem:[%s3 + $0x10] sm:$0xff]
    %v194 = vld [vmem:[%s3 + $0x18] sm:$0xff]
    %v196 = vsel %vm61, %v191, 0
    %v199 = vsel %vm61, %v192, 0
    %v202 = vsel %vm61, %v193, 0
    %v205 = vsel %vm61, %v194, 0
    %207 = vmatprep.subr.mxu0 0.0
    %208 = vmatpush1.msra.mxu0 %v49
    %209 = vmatprep.subr.mxu0 0.0
    %210 = vmatpush1.msra.mxu0 %v50
    %211 = vmatprep.subr.mxu0 0.0
    %212 = vmatpush1.msra.mxu0 %v51
    %213 = vmatprep.subr.mxu0 0.0
    %214 = vmatpush1.msra.mxu0 %v52
    %215 = vmatprep.subr.mxu0 0.0
    %216 = vmatpush1.msra.mxu0 0.0
    %217 = vmatprep.subr.mxu0 0.0
    %218 = vmatpush1.msra.mxu0 0.0
    %219 = vmatprep.subr.mxu0 0.0
    %220 = vmatpush1.msra.mxu0 0.0
    %221 = vmatprep.subr.mxu0 0.0
    %222 = vmatpush1.msra.mxu0 0.0
    %223 = vmatprep.subr.mxu0 0.0
    %224 = vmatpush1.msra.mxu0 0.0
    %225 = vmatprep.subr.mxu0 0.0
    %226 = vmatpush1.msra.mxu0 0.0
    %227 = vmatprep.subr.mxu0 0.0
    %228 = vmatpush1.msra.mxu0 0.0
    %229 = vmatprep.subr.mxu0 0.0
    %230 = vmatpush1.msra.mxu0 0.0
    %231 = vmatprep.subr.mxu0 0.0
    %232 = vmatpush1.msra.mxu0 0.0
    %233 = vmatprep.subr.mxu0 0.0
    %234 = vmatpush1.msra.mxu0 0.0
    %235 = vmatprep.subr.mxu0 0.0
    %236 = vmatpush1.msra.mxu0 0.0
    %237 = vmatprep.subr.mxu0 0.0
    %238 = vmatpush1.msra.mxu0 0.0
    %239 = vmatprep.subr.mxu0 0.0
    %240 = vmatpush1.msra.mxu0 0.0
    %241 = vmatprep.subr.mxu0 0.0
    %242 = vmatpush1.msra.mxu0 0.0
    %243 = vmatprep.subr.mxu0 0.0
    %244 = vmatpush1.msra.mxu0 0.0
    %245 = vmatprep.subr.mxu0 0.0
    %246 = vmatpush1.msra.mxu0 0.0
    %247 = vmatprep.subr.mxu0 0.0
    %248 = vmatpush1.msra.mxu0 0.0
    %249 = vmatprep.subr.mxu0 0.0
    %250 = vmatpush1.msra.mxu0 0.0
    %251 = vmatprep.subr.mxu0 0.0
    %252 = vmatpush1.msra.mxu0 0.0
    %253 = vmatprep.subr.mxu0 0.0
    %254 = vmatpush1.msra.mxu0 0.0
    %255 = vmatprep.subr.mxu0 0.0
    %256 = vmatpush1.msra.mxu0 0.0
    %257 = vmatprep.subr.mxu0 0.0
    %258 = vmatpush1.msra.mxu0 0.0
    %259 = vmatprep.subr.mxu0 0.0
    %260 = vmatpush1.msra.mxu0 0.0
    %261 = vmatprep.subr.mxu0 0.0
    %262 = vmatpush1.msra.mxu0 0.0
    %263 = vmatprep.subr.mxu0 0.0
    %264 = vmatpush1.msra.mxu0 0.0
    %265 = vmatprep.subr.mxu0 0.0
    %266 = vmatpush1.msra.mxu0 0.0
    %267 = vmatprep.subr.mxu0 0.0
    %268 = vmatpush1.msra.mxu0 0.0
    %269 = vmatprep.subr.mxu0 0.0
    %270 = vmatpush1.msra.mxu0 0.0
    %271 = vmatprep.mubr.f32.mxu0 0.0
    %272 = vmatmul.mubr.f32.gmra.mrb[0].mxu0 %v196
    %v273 = vpop.f32.mrb[0].mxu0
    %v274 = vadd.f32 0.0, %v273
    %v275 = vpop.f32.mrb[0].mxu0
    %276 = vmatprep.mubr.f32.mxu0 0.0
    %277 = vmatmul.mubr.f32.gmra.mrb[0].mxu0 %v199
    %v278 = vpop.f32.mrb[0].mxu0
    %v279 = vadd.f32 0.0, %v278
    %v280 = vpop.f32.mrb[0].mxu0
    %281 = vmatprep.mubr.f32.mxu0 0.0
    %282 = vmatmul.mubr.f32.gmra.mrb[0].mxu0 %v202
    %v283 = vpop.f32.mrb[0].mxu0
    %v284 = vadd.f32 0.0, %v283
    %v285 = vpop.f32.mrb[0].mxu0
    %286 = vmatprep.mubr.f32.mxu0 0.0
    %287 = vmatmul.mubr.f32.gmra.mrb[0].mxu0 %v205
    %v288 = vpop.f32.mrb[0].mxu0
    %v289 = vadd.f32 0.0, %v288
    %v290 = vpop.f32.mrb[0].mxu0
    %291 = vdwg.mxu0
    %292 = vmatprep.subr.mxu0 0.0
    %293 = vmatpush1.msra.mxu0 %v45
    %294 = vmatprep.subr.mxu0 0.0
    %295 = vmatpush1.msra.mxu0 %v46
    %296 = vmatprep.subr.mxu0 0.0
    %297 = vmatpush1.msra.mxu0 %v47
    %298 = vmatprep.subr.mxu0 0.0
    %299 = vmatpush1.msra.mxu0 %v48
    %300 = vmatprep.subr.mxu0 0.0
    %301 = vmatpush1.msra.mxu0 0.0
    %302 = vmatprep.subr.mxu0 0.0
    %303 = vmatpush1.msra.mxu0 0.0
    %304 = vmatprep.subr.mxu0 0.0
    %305 = vmatpush1.msra.mxu0 0.0
    %306 = vmatprep.subr.mxu0 0.0
    %307 = vmatpush1.msra.mxu0 0.0
    %308 = vmatprep.subr.mxu0 0.0
    %309 = vmatpush1.msra.mxu0 0.0
    %310 = vmatprep.subr.mxu0 0.0
    %311 = vmatpush1.msra.mxu0 0.0
    %312 = vmatprep.subr.mxu0 0.0
    %313 = vmatpush1.msra.mxu0 0.0
    %314 = vmatprep.subr.mxu0 0.0
    %315 = vmatpush1.msra.mxu0 0.0
    %316 = vmatprep.subr.mxu0 0.0
    %317 = vmatpush1.msra.mxu0 0.0
    %318 = vmatprep.subr.mxu0 0.0
    %319 = vmatpush1.msra.mxu0 0.0
    %320 = vmatprep.subr.mxu0 0.0
    %321 = vmatpush1.msra.mxu0 0.0
    %322 = vmatprep.subr.mxu0 0.0
    %323 = vmatpush1.msra.mxu0 0.0
    %324 = vmatprep.subr.mxu0 0.0
    %325 = vmatpush1.msra.mxu0 0.0
    %326 = vmatprep.subr.mxu0 0.0
    %327 = vmatpush1.msra.mxu0 0.0
    %328 = vmatprep.subr.mxu0 0.0
    %329 = vmatpush1.msra.mxu0 0.0
    %330 = vmatprep.subr.mxu0 0.0
    %331 = vmatpush1.msra.mxu0 0.0
    %332 = vmatprep.subr.mxu0 0.0
    %333 = vmatpush1.msra.mxu0 0.0
    %334 = vmatprep.subr.mxu0 0.0
    %335 = vmatpush1.msra.mxu0 0.0
    %336 = vmatprep.subr.mxu0 0.0
    %337 = vmatpush1.msra.mxu0 0.0
    %338 = vmatprep.subr.mxu0 0.0
    %339 = vmatpush1.msra.mxu0 0.0
    %340 = vmatprep.subr.mxu0 0.0
    %341 = vmatpush1.msra.mxu0 0.0
    %342 = vmatprep.subr.mxu0 0.0
    %343 = vmatpush1.msra.mxu0 0.0
    %344 = vmatprep.subr.mxu0 0.0
    %345 = vmatpush1.msra.mxu0 0.0
    %346 = vmatprep.subr.mxu0 0.0
    %347 = vmatpush1.msra.mxu0 0.0
    %348 = vmatprep.subr.mxu0 0.0
    %349 = vmatpush1.msra.mxu0 0.0
    %350 = vmatprep.subr.mxu0 0.0
    %351 = vmatpush1.msra.mxu0 0.0
    %352 = vmatprep.subr.mxu0 0.0
    %353 = vmatpush1.msra.mxu0 0.0
    %354 = vmatprep.subr.mxu0 0.0
    %355 = vmatpush1.msra.mxu0 0.0
    %356 = vmatprep.mubr.f32.mxu0 0.0
    %357 = vmatmul.mubr.f32.gmra.mrb[0].mxu0 %v196
    %v358 = vpop.f32.mrb[0].mxu0
    %v359 = vadd.f32 0.0, %v358
    %v360 = vpop.f32.mrb[0].mxu0
    %361 = vmatprep.mubr.f32.mxu0 0.0
    %362 = vmatmul.mubr.f32.gmra.mrb[0].mxu0 %v199
    %v363 = vpop.f32.mrb[0].mxu0
    %v364 = vadd.f32 0.0, %v363
    %v365 = vpop.f32.mrb[0].mxu0
    %366 = vmatprep.mubr.f32.mxu0 0.0
    %367 = vmatmul.mubr.f32.gmra.mrb[0].mxu0 %v202
    %v368 = vpop.f32.mrb[0].mxu0
    %v369 = vadd.f32 0.0, %v368
    %v370 = vpop.f32.mrb[0].mxu0
    %371 = vmatprep.mubr.f32.mxu0 0.0
    %372 = vmatmul.mubr.f32.gmra.mrb[0].mxu0 %v205
    %v373 = vpop.f32.mrb[0].mxu0
    %v374 = vadd.f32 0.0, %v373
    %v375 = vpop.f32.mrb[0].mxu0
    %376 = vdwg.mxu0
    %vm377 = vcmp.lt.s32.totalorder %v41, 25
    %vm378 = vcmp.lt.s32.totalorder %v42, 25
    %vm379 = vcmp.lt.s32.totalorder %v43, 25
    %vm380 = vcmp.lt.s32.totalorder %v44, 25
    %v381 = vsel %vm377, 0.0, 1e+30
    %v382 = vsel %vm378, 0.0, 1e+30
    %v383 = vsel %vm379, 0.0, 1e+30
    %v384 = vsel %vm380, 0.0, 1e+30
    %v385 = vmul.f32 %v359, 0.125
    %v386 = vmul.f32 %v364, 0.125
    %v387 = vmul.f32 %v369, 0.125
    %v388 = vmul.f32 %v374, 0.125
    %v389 = vmul.f32 %v359, %v385
    %v390 = vmul.f32 %v364, %v386
    %v391 = vmul.f32 %v369, %v387
    %v392 = vmul.f32 %v374, %v388
    %v393 = vsub.f32 %v274, %v389
    %v394 = vsub.f32 %v279, %v390
    %v395 = vsub.f32 %v284, %v391
    %v396 = vsub.f32 %v289, %v392
    %v397 = vmax.f32 %v393, 0.0
    %v398 = vmax.f32 %v394, 0.0
    %v399 = vmax.f32 %v395, 0.0
    %v400 = vmax.f32 %v396, 0.0
    %v401 = vmul.f32 %v397, 0.14285715
    %v402 = vmul.f32 %v398, 0.14285715
    %v403 = vmul.f32 %v399, 0.14285715
    %v404 = vmul.f32 %v400, 0.14285715
    %v405 = vrsqrt.pop %v401
    %v406 = vmul.f32 %v401, %v405
    %vm407 = vcmp.eq.f32.partialorder %v401, inf
    %v408 = vsel %vm407, %v401, %v406
    %vm409 = vcmp.eq.f32.partialorder %v401, 0.0
    %v410 = vand.u32 %v401, 2147483648
    %v411 = vsel %vm409, %v410, %v408
    %v412 = vrsqrt.pop %v402
    %v413 = vmul.f32 %v402, %v412
    %vm414 = vcmp.eq.f32.partialorder %v402, inf
    %v415 = vsel %vm414, %v402, %v413
    %vm416 = vcmp.eq.f32.partialorder %v402, 0.0
    %v417 = vand.u32 %v402, 2147483648
    %v418 = vsel %vm416, %v417, %v415
    %v419 = vrsqrt.pop %v403
    %v420 = vmul.f32 %v403, %v419
    %vm421 = vcmp.eq.f32.partialorder %v403, inf
    %v422 = vsel %vm421, %v403, %v420
    %vm423 = vcmp.eq.f32.partialorder %v403, 0.0
    %v424 = vand.u32 %v403, 2147483648
    %v425 = vsel %vm423, %v424, %v422
    %v426 = vrsqrt.pop %v404
    %v427 = vmul.f32 %v404, %v426
    %vm428 = vcmp.eq.f32.partialorder %v404, inf
    %v429 = vsel %vm428, %v404, %v427
    %vm430 = vcmp.eq.f32.partialorder %v404, 0.0
    %v431 = vand.u32 %v404, 2147483648
    %v432 = vsel %vm430, %v431, %v429
    %v433 = vadd.f32 %v411, 1e-08
    %v434 = vadd.f32 %v418, 1e-08
    %v435 = vadd.f32 %v425, 1e-08
    %v436 = vadd.f32 %v432, 1e-08
    %v437 = vrcp.pop %v433
    %v438 = vrcp.pop %v434
    %v439 = vrcp.pop %v435
    %v440 = vrcp.pop %v436
    %v441 = vmul.f32 %v433, %v437
    %v442 = vmul.f32 %v434, %v438
    %v443 = vmul.f32 %v435, %v439
    %v444 = vmul.f32 %v436, %v440
    %v445 = vsub.f32 2.0, %v441
    %v446 = vsub.f32 2.0, %v442
    %v447 = vsub.f32 2.0, %v443
    %v448 = vsub.f32 2.0, %v444
    %v449 = vmul.f32 %v437, %v445
    %v450 = vmul.f32 %v438, %v446
    %v451 = vmul.f32 %v439, %v447
    %v452 = vmul.f32 %v440, %v448
    %v453 = vmul.f32 %v397, %v449
    %v454 = vmul.f32 %v398, %v450
    %v455 = vmul.f32 %v399, %v451
    %v456 = vmul.f32 %v400, %v452
    %v457 = vmul.f32 %v453, %v449
    %v458 = vmul.f32 %v454, %v450
    %v459 = vmul.f32 %v455, %v451
    %v460 = vmul.f32 %v456, %v452
    %v461 = vadd.f32 %v457, %v381
    %v462 = vadd.f32 %v458, %v382
    %v463 = vadd.f32 %v459, %v383
    %v464 = vadd.f32 %v460, %v384
    %s465 = sld [smem:[#allocation3]]
    %s466 = sld [smem:[#allocation3 + $0x1]]
    %v467 = vstv %s466
    %v468 = vmul.f32 %v467, %v385
    %v469 = vmul.f32 %v467, %v386
    %v470 = vmul.f32 %v467, %v387
    %v471 = vmul.f32 %v467, %v388
    %v472 = vsub.f32 %v153, %v468
    %v473 = vsub.f32 %v158, %v469
    %v474 = vsub.f32 %v163, %v470
    %v475 = vsub.f32 %v168, %v471
    %v476 = vmul.f32 %v472, %v449
    %v477 = vmul.f32 %v473, %v450
    %v478 = vmul.f32 %v474, %v451
    %v479 = vmul.f32 %v475, %v452
    %v480 = vstv %s465
    %v481 = vadd.f32 %v480, %v461
    %v482 = vadd.f32 %v480, %v462
    %v483 = vadd.f32 %v480, %v463
    %v484 = vadd.f32 %v480, %v464
    %v485 = vmul.f32 %v476, 2.0
    %v486 = vmul.f32 %v477, 2.0
    %v487 = vmul.f32 %v478, 2.0
    %v488 = vmul.f32 %v479, 2.0
    %v489 = vsub.f32 %v481, %v485
    %v490 = vsub.f32 %v482, %v486
    %v491 = vsub.f32 %v483, %v487
    %v492 = vsub.f32 %v484, %v488
    %v493 = vmax.f32 %v489, 0.0
    %v494 = vmax.f32 %v490, 0.0
    %v495 = vmax.f32 %v491, 0.0
    %v496 = vmax.f32 %v492, 0.0
    %v497 = vld [vmem:[%s4] sm:$0xff]
    %v498 = vld [vmem:[%s4 + $0x8] sm:$0xff]
    %v499 = vld [vmem:[%s4 + $0x10] sm:$0xff]
    %v500 = vld [vmem:[%s4 + $0x18] sm:$0xff]
    %502 = vset.pattern.permute.xlu0 0
    %503 = vperm.xlu0 %502, %v497
    %v504 = vpop.permute.xlu0 %503
    %507 = vset.pattern.permute.xlu0 0
    %508 = vperm.xlu0 %507, %v498
    %v509 = vpop.permute.xlu0 %508
    %512 = vset.pattern.permute.xlu0 0
    %513 = vperm.xlu0 %512, %v499
    %v514 = vpop.permute.xlu0 %513
    %517 = vset.pattern.permute.xlu0 0
    %518 = vperm.xlu0 %517, %v500
    %v519 = vpop.permute.xlu0 %518
    %v521 = vmul.f32 %v493, %v504
    %v522 = vmul.f32 %v494, %v509
    %v523 = vmul.f32 %v495, %v514
    %v524 = vmul.f32 %v496, %v519
    %v525 = vmin.f32 %v521, %v522
    %v526 = vmin.f32 %v523, %v524
    %v527 = vmin.f32 %v525, %v526
    %v528 = vrot.slane %v527, 4
    %v529 = vmin.f32 %v527, %v528
    %v530 = vrot.slane %v529, 2
    %v531 = vmin.f32 %v529, %v530
    %v532 = vrot.slane %v531, 1
    %v533 = vmin.f32 %v531, %v532
    %v534 = vmax.f32 %v533, 0.0
    %535 = vst [vmem:[#allocation2] sm:$0x1] %v534
    %s536 = sld [smem:[#allocation3 + $0x6]]
    %s537 = sld [smem:[#allocation3 + $0x7]]
    %v538 = vstv %s537
    %v539 = vmul.f32 %v538, %v385
    %v540 = vmul.f32 %v538, %v386
    %v541 = vmul.f32 %v538, %v387
    %v542 = vmul.f32 %v538, %v388
    %v543 = vsub.f32 %v173, %v539
    %v544 = vsub.f32 %v178, %v540
    %v545 = vsub.f32 %v183, %v541
    %v546 = vsub.f32 %v188, %v542
    %v547 = vmul.f32 %v543, %v449
    %v548 = vmul.f32 %v544, %v450
    %v549 = vmul.f32 %v545, %v451
    %v550 = vmul.f32 %v546, %v452
    %v551 = vstv %s536
    %v552 = vadd.f32 %v551, %v461
    %v553 = vadd.f32 %v551, %v462
    %v554 = vadd.f32 %v551, %v463
    %v555 = vadd.f32 %v551, %v464
    %v556 = vmul.f32 %v547, 2.0
    %v557 = vmul.f32 %v548, 2.0
    %v558 = vmul.f32 %v549, 2.0
    %v559 = vmul.f32 %v550, 2.0
    %v560 = vsub.f32 %v552, %v556
    %v561 = vsub.f32 %v553, %v557
    %v562 = vsub.f32 %v554, %v558
    %v563 = vsub.f32 %v555, %v559
    %v564 = vmax.f32 %v560, 0.0
    %v565 = vmax.f32 %v561, 0.0
    %v566 = vmax.f32 %v562, 0.0
    %v567 = vmax.f32 %v563, 0.0
    %s568 = scalar_lea.vmem %s4, 96
    %v569 = vld [vmem:[%s568] sm:$0xff]
    %v570 = vld [vmem:[%s568 + $0x8] sm:$0xff]
    %v571 = vld [vmem:[%s568 + $0x10] sm:$0xff]
    %v572 = vld [vmem:[%s568 + $0x18] sm:$0xff]
    %574 = vset.pattern.permute.xlu0 0
    %575 = vperm.xlu0 %574, %v569
    %v576 = vpop.permute.xlu0 %575
    %579 = vset.pattern.permute.xlu0 0
    %580 = vperm.xlu0 %579, %v570
    %v581 = vpop.permute.xlu0 %580
    %584 = vset.pattern.permute.xlu0 0
    %585 = vperm.xlu0 %584, %v571
    %v586 = vpop.permute.xlu0 %585
    %589 = vset.pattern.permute.xlu0 0
    %590 = vperm.xlu0 %589, %v572
    %v591 = vpop.permute.xlu0 %590
    %v593 = vmul.f32 %v564, %v576
    %v594 = vmul.f32 %v565, %v581
    %v595 = vmul.f32 %v566, %v586
    %v596 = vmul.f32 %v567, %v591
    %v597 = vmin.f32 %v593, %v594
    %v598 = vmin.f32 %v595, %v596
    %v599 = vmin.f32 %v597, %v598
    %v600 = vrot.slane %v599, 4
    %v601 = vmin.f32 %v599, %v600
    %v602 = vrot.slane %v601, 2
    %v603 = vmin.f32 %v601, %v602
    %v604 = vrot.slane %v603, 1
    %v605 = vmin.f32 %v603, %v604
    %v606 = vmax.f32 %v605, 0.0
    %607 = vst [vmem:[#allocation2 + $0x3] sm:$0x1] %v606
    %s608 = scalar_lea.vmem %s1, 32
    %v609 = vld [vmem:[%s608] sm:$0xff]
    %v610 = vld [vmem:[%s608 + $0x8] sm:$0xff]
    %v611 = vld [vmem:[%s608 + $0x10] sm:$0xff]
    %v612 = vld [vmem:[%s608 + $0x18] sm:$0xff]
    %v613 = vmul.f32 %v609, %v609
    %v614 = vmul.f32 %v610, %v610
    %v615 = vmul.f32 %v611, %v611
    %v616 = vmul.f32 %v612, %v612
    %s617 = scalar_lea.vmem %s2, 64
    %v618 = vld [vmem:[%s617] sm:$0xff]
    %v619 = vld [vmem:[%s617 + $0x8] sm:$0xff]
    %v620 = vld [vmem:[%s617 + $0x10] sm:$0xff]
    %v621 = vld [vmem:[%s617 + $0x18] sm:$0xff]
    %v622 = vld [vmem:[%s617 + $0x20] sm:$0xff]
    %v623 = vld [vmem:[%s617 + $0x28] sm:$0xff]
    %v624 = vld [vmem:[%s617 + $0x30] sm:$0xff]
    %v625 = vld [vmem:[%s617 + $0x38] sm:$0xff]
    %v627 = vsel %vm61, %v618, 0
    %v630 = vsel %vm61, %v619, 0
    %v633 = vsel %vm61, %v620, 0
    %v636 = vsel %vm61, %v621, 0
    %v639 = vsel %vm61, %v622, 0
    %v642 = vsel %vm61, %v623, 0
    %v645 = vsel %vm61, %v624, 0
    %v648 = vsel %vm61, %v625, 0
    %650 = vmatprep.subr.mxu0 0.0
    %651 = vmatpush1.msra.mxu0 %v609
    %652 = vmatprep.subr.mxu0 0.0
    %653 = vmatpush1.msra.mxu0 %v610
    %654 = vmatprep.subr.mxu0 0.0
    %655 = vmatpush1.msra.mxu0 %v611
    %656 = vmatprep.subr.mxu0 0.0
    %657 = vmatpush1.msra.mxu0 %v612
    %658 = vmatprep.subr.mxu0 0.0
    %659 = vmatpush1.msra.mxu0 0.0
    %660 = vmatprep.subr.mxu0 0.0
    %661 = vmatpush1.msra.mxu0 0.0
    %662 = vmatprep.subr.mxu0 0.0
    %663 = vmatpush1.msra.mxu0 0.0
    %664 = vmatprep.subr.mxu0 0.0
    %665 = vmatpush1.msra.mxu0 0.0
    %666 = vmatprep.subr.mxu0 0.0
    %667 = vmatpush1.msra.mxu0 0.0
    %668 = vmatprep.subr.mxu0 0.0
    %669 = vmatpush1.msra.mxu0 0.0
    %670 = vmatprep.subr.mxu0 0.0
    %671 = vmatpush1.msra.mxu0 0.0
    %672 = vmatprep.subr.mxu0 0.0
    %673 = vmatpush1.msra.mxu0 0.0
    %674 = vmatprep.subr.mxu0 0.0
    %675 = vmatpush1.msra.mxu0 0.0
    %676 = vmatprep.subr.mxu0 0.0
    %677 = vmatpush1.msra.mxu0 0.0
    %678 = vmatprep.subr.mxu0 0.0
    %679 = vmatpush1.msra.mxu0 0.0
    %680 = vmatprep.subr.mxu0 0.0
    %681 = vmatpush1.msra.mxu0 0.0
    %682 = vmatprep.subr.mxu0 0.0
    %683 = vmatpush1.msra.mxu0 0.0
    %684 = vmatprep.subr.mxu0 0.0
    %685 = vmatpush1.msra.mxu0 0.0
    %686 = vmatprep.subr.mxu0 0.0
    %687 = vmatpush1.msra.mxu0 0.0
    %688 = vmatprep.subr.mxu0 0.0
    %689 = vmatpush1.msra.mxu0 0.0
    %690 = vmatprep.subr.mxu0 0.0
    %691 = vmatpush1.msra.mxu0 0.0
    %692 = vmatprep.subr.mxu0 0.0
    %693 = vmatpush1.msra.mxu0 0.0
    %694 = vmatprep.subr.mxu0 0.0
    %695 = vmatpush1.msra.mxu0 0.0
    %696 = vmatprep.subr.mxu0 0.0
    %697 = vmatpush1.msra.mxu0 0.0
    %698 = vmatprep.subr.mxu0 0.0
    %699 = vmatpush1.msra.mxu0 0.0
    %700 = vmatprep.subr.mxu0 0.0
    %701 = vmatpush1.msra.mxu0 0.0
    %702 = vmatprep.subr.mxu0 0.0
    %703 = vmatpush1.msra.mxu0 0.0
    %704 = vmatprep.subr.mxu0 0.0
    %705 = vmatpush1.msra.mxu0 0.0
    %706 = vmatprep.subr.mxu0 0.0
    %707 = vmatpush1.msra.mxu0 0.0
    %708 = vmatprep.subr.mxu0 0.0
    %709 = vmatpush1.msra.mxu0 0.0
    %710 = vmatprep.subr.mxu0 0.0
    %711 = vmatpush1.msra.mxu0 0.0
    %712 = vmatprep.subr.mxu0 0.0
    %713 = vmatpush1.msra.mxu0 0.0
    %714 = vmatprep.mubr.f32.mxu0 0.0
    %715 = vmatmul.mubr.f32.gmra.mrb[0].mxu0 %v627
    %v716 = vpop.f32.mrb[0].mxu0
    %v717 = vadd.f32 0.0, %v716
    %v718 = vpop.f32.mrb[0].mxu0
    %719 = vmatprep.mubr.f32.mxu0 0.0
    %720 = vmatmul.mubr.f32.gmra.mrb[0].mxu0 %v630
    %v721 = vpop.f32.mrb[0].mxu0
    %v722 = vadd.f32 0.0, %v721
    %v723 = vpop.f32.mrb[0].mxu0
    %724 = vmatprep.mubr.f32.mxu0 0.0
    %725 = vmatmul.mubr.f32.gmra.mrb[0].mxu0 %v633
    %v726 = vpop.f32.mrb[0].mxu0
    %v727 = vadd.f32 0.0, %v726
    %v728 = vpop.f32.mrb[0].mxu0
    %729 = vmatprep.mubr.f32.mxu0 0.0
    %730 = vmatmul.mubr.f32.gmra.mrb[0].mxu0 %v636
    %v731 = vpop.f32.mrb[0].mxu0
    %v732 = vadd.f32 0.0, %v731
    %v733 = vpop.f32.mrb[0].mxu0
    %734 = vmatprep.mubr.f32.mxu0 0.0
    %735 = vmatmul.mubr.f32.gmra.mrb[0].mxu0 %v639
    %v736 = vpop.f32.mrb[0].mxu0
    %v737 = vadd.f32 0.0, %v736
    %v738 = vpop.f32.mrb[0].mxu0
    %739 = vmatprep.mubr.f32.mxu0 0.0
    %740 = vmatmul.mubr.f32.gmra.mrb[0].mxu0 %v642
    %v741 = vpop.f32.mrb[0].mxu0
    %v742 = vadd.f32 0.0, %v741
    %v743 = vpop.f32.mrb[0].mxu0
    %744 = vmatprep.mubr.f32.mxu0 0.0
    %745 = vmatmul.mubr.f32.gmra.mrb[0].mxu0 %v645
    %v746 = vpop.f32.mrb[0].mxu0
    %v747 = vadd.f32 0.0, %v746
    %v748 = vpop.f32.mrb[0].mxu0
    %749 = vmatprep.mubr.f32.mxu0 0.0
    %750 = vmatmul.mubr.f32.gmra.mrb[0].mxu0 %v648
    %v751 = vpop.f32.mrb[0].mxu0
    %v752 = vadd.f32 0.0, %v751
    %v753 = vpop.f32.mrb[0].mxu0
    %754 = vdwg.mxu0
    %s755 = scalar_lea.vmem %s3, 32
    %v756 = vld [vmem:[%s755] sm:$0xff]
    %v757 = vld [vmem:[%s755 + $0x8] sm:$0xff]
    %v758 = vld [vmem:[%s755 + $0x10] sm:$0xff]
    %v759 = vld [vmem:[%s755 + $0x18] sm:$0xff]
    %v761 = vsel %vm61, %v756, 0
    %v764 = vsel %vm61, %v757, 0
    %v767 = vsel %vm61, %v758, 0
    %v770 = vsel %vm61, %v759, 0
    %772 = vmatprep.subr.mxu0 0.0
    %773 = vmatpush1.msra.mxu0 %v613
    %774 = vmatprep.subr.mxu0 0.0
    %775 = vmatpush1.msra.mxu0 %v614
    %776 = vmatprep.subr.mxu0 0.0
    %777 = vmatpush1.msra.mxu0 %v615
    %778 = vmatprep.subr.mxu0 0.0
    %779 = vmatpush1.msra.mxu0 %v616
    %780 = vmatprep.subr.mxu0 0.0
    %781 = vmatpush1.msra.mxu0 0.0
    %782 = vmatprep.subr.mxu0 0.0
    %783 = vmatpush1.msra.mxu0 0.0
    %784 = vmatprep.subr.mxu0 0.0
    %785 = vmatpush1.msra.mxu0 0.0
    %786 = vmatprep.subr.mxu0 0.0
    %787 = vmatpush1.msra.mxu0 0.0
    %788 = vmatprep.subr.mxu0 0.0
    %789 = vmatpush1.msra.mxu0 0.0
    %790 = vmatprep.subr.mxu0 0.0
    %791 = vmatpush1.msra.mxu0 0.0
    %792 = vmatprep.subr.mxu0 0.0
    %793 = vmatpush1.msra.mxu0 0.0
    %794 = vmatprep.subr.mxu0 0.0
    %795 = vmatpush1.msra.mxu0 0.0
    %796 = vmatprep.subr.mxu0 0.0
    %797 = vmatpush1.msra.mxu0 0.0
    %798 = vmatprep.subr.mxu0 0.0
    %799 = vmatpush1.msra.mxu0 0.0
    %800 = vmatprep.subr.mxu0 0.0
    %801 = vmatpush1.msra.mxu0 0.0
    %802 = vmatprep.subr.mxu0 0.0
    %803 = vmatpush1.msra.mxu0 0.0
    %804 = vmatprep.subr.mxu0 0.0
    %805 = vmatpush1.msra.mxu0 0.0
    %806 = vmatprep.subr.mxu0 0.0
    %807 = vmatpush1.msra.mxu0 0.0
    %808 = vmatprep.subr.mxu0 0.0
    %809 = vmatpush1.msra.mxu0 0.0
    %810 = vmatprep.subr.mxu0 0.0
    %811 = vmatpush1.msra.mxu0 0.0
    %812 = vmatprep.subr.mxu0 0.0
    %813 = vmatpush1.msra.mxu0 0.0
    %814 = vmatprep.subr.mxu0 0.0
    %815 = vmatpush1.msra.mxu0 0.0
    %816 = vmatprep.subr.mxu0 0.0
    %817 = vmatpush1.msra.mxu0 0.0
    %818 = vmatprep.subr.mxu0 0.0
    %819 = vmatpush1.msra.mxu0 0.0
    %820 = vmatprep.subr.mxu0 0.0
    %821 = vmatpush1.msra.mxu0 0.0
    %822 = vmatprep.subr.mxu0 0.0
    %823 = vmatpush1.msra.mxu0 0.0
    %824 = vmatprep.subr.mxu0 0.0
    %825 = vmatpush1.msra.mxu0 0.0
    %826 = vmatprep.subr.mxu0 0.0
    %827 = vmatpush1.msra.mxu0 0.0
    %828 = vmatprep.subr.mxu0 0.0
    %829 = vmatpush1.msra.mxu0 0.0
    %830 = vmatprep.subr.mxu0 0.0
    %831 = vmatpush1.msra.mxu0 0.0
    %832 = vmatprep.subr.mxu0 0.0
    %833 = vmatpush1.msra.mxu0 0.0
    %834 = vmatprep.subr.mxu0 0.0
    %835 = vmatpush1.msra.mxu0 0.0
    %836 = vmatprep.mubr.f32.mxu0 0.0
    %837 = vmatmul.mubr.f32.gmra.mrb[0].mxu0 %v761
    %v838 = vpop.f32.mrb[0].mxu0
    %v839 = vadd.f32 0.0, %v838
    %v840 = vpop.f32.mrb[0].mxu0
    %841 = vmatprep.mubr.f32.mxu0 0.0
    %842 = vmatmul.mubr.f32.gmra.mrb[0].mxu0 %v764
    %v843 = vpop.f32.mrb[0].mxu0
    %v844 = vadd.f32 0.0, %v843
    %v845 = vpop.f32.mrb[0].mxu0
    %846 = vmatprep.mubr.f32.mxu0 0.0
    %847 = vmatmul.mubr.f32.gmra.mrb[0].mxu0 %v767
    %v848 = vpop.f32.mrb[0].mxu0
    %v849 = vadd.f32 0.0, %v848
    %v850 = vpop.f32.mrb[0].mxu0
    %851 = vmatprep.mubr.f32.mxu0 0.0
    %852 = vmatmul.mubr.f32.gmra.mrb[0].mxu0 %v770
    %v853 = vpop.f32.mrb[0].mxu0
    %v854 = vadd.f32 0.0, %v853
    %v855 = vpop.f32.mrb[0].mxu0
    %856 = vdwg.mxu0
    %857 = vmatprep.subr.mxu0 0.0
    %858 = vmatpush1.msra.mxu0 %v609
    %859 = vmatprep.subr.mxu0 0.0
    %860 = vmatpush1.msra.mxu0 %v610
    %861 = vmatprep.subr.mxu0 0.0
    %862 = vmatpush1.msra.mxu0 %v611
    %863 = vmatprep.subr.mxu0 0.0
    %864 = vmatpush1.msra.mxu0 %v612
    %865 = vmatprep.subr.mxu0 0.0
    %866 = vmatpush1.msra.mxu0 0.0
    %867 = vmatprep.subr.mxu0 0.0
    %868 = vmatpush1.msra.mxu0 0.0
    %869 = vmatprep.subr.mxu0 0.0
    %870 = vmatpush1.msra.mxu0 0.0
    %871 = vmatprep.subr.mxu0 0.0
    %872 = vmatpush1.msra.mxu0 0.0
    %873 = vmatprep.subr.mxu0 0.0
    %874 = vmatpush1.msra.mxu0 0.0
    %875 = vmatprep.subr.mxu0 0.0
    %876 = vmatpush1.msra.mxu0 0.0
    %877 = vmatprep.subr.mxu0 0.0
    %878 = vmatpush1.msra.mxu0 0.0
    %879 = vmatprep.subr.mxu0 0.0
    %880 = vmatpush1.msra.mxu0 0.0
    %881 = vmatprep.subr.mxu0 0.0
    %882 = vmatpush1.msra.mxu0 0.0
    %883 = vmatprep.subr.mxu0 0.0
    %884 = vmatpush1.msra.mxu0 0.0
    %885 = vmatprep.subr.mxu0 0.0
    %886 = vmatpush1.msra.mxu0 0.0
    %887 = vmatprep.subr.mxu0 0.0
    %888 = vmatpush1.msra.mxu0 0.0
    %889 = vmatprep.subr.mxu0 0.0
    %890 = vmatpush1.msra.mxu0 0.0
    %891 = vmatprep.subr.mxu0 0.0
    %892 = vmatpush1.msra.mxu0 0.0
    %893 = vmatprep.subr.mxu0 0.0
    %894 = vmatpush1.msra.mxu0 0.0
    %895 = vmatprep.subr.mxu0 0.0
    %896 = vmatpush1.msra.mxu0 0.0
    %897 = vmatprep.subr.mxu0 0.0
    %898 = vmatpush1.msra.mxu0 0.0
    %899 = vmatprep.subr.mxu0 0.0
    %900 = vmatpush1.msra.mxu0 0.0
    %901 = vmatprep.subr.mxu0 0.0
    %902 = vmatpush1.msra.mxu0 0.0
    %903 = vmatprep.subr.mxu0 0.0
    %904 = vmatpush1.msra.mxu0 0.0
    %905 = vmatprep.subr.mxu0 0.0
    %906 = vmatpush1.msra.mxu0 0.0
    %907 = vmatprep.subr.mxu0 0.0
    %908 = vmatpush1.msra.mxu0 0.0
    %909 = vmatprep.subr.mxu0 0.0
    %910 = vmatpush1.msra.mxu0 0.0
    %911 = vmatprep.subr.mxu0 0.0
    %912 = vmatpush1.msra.mxu0 0.0
    %913 = vmatprep.subr.mxu0 0.0
    %914 = vmatpush1.msra.mxu0 0.0
    %915 = vmatprep.subr.mxu0 0.0
    %916 = vmatpush1.msra.mxu0 0.0
    %917 = vmatprep.subr.mxu0 0.0
    %918 = vmatpush1.msra.mxu0 0.0
    %919 = vmatprep.subr.mxu0 0.0
    %920 = vmatpush1.msra.mxu0 0.0
    %921 = vmatprep.mubr.f32.mxu0 0.0
    %922 = vmatmul.mubr.f32.gmra.mrb[0].mxu0 %v761
    %v923 = vpop.f32.mrb[0].mxu0
    %v924 = vadd.f32 0.0, %v923
    %v925 = vpop.f32.mrb[0].mxu0
    %926 = vmatprep.mubr.f32.mxu0 0.0
    %927 = vmatmul.mubr.f32.gmra.mrb[0].mxu0 %v764
    %v928 = vpop.f32.mrb[0].mxu0
    %v929 = vadd.f32 0.0, %v928
    %v930 = vpop.f32.mrb[0].mxu0
    %931 = vmatprep.mubr.f32.mxu0 0.0
    %932 = vmatmul.mubr.f32.gmra.mrb[0].mxu0 %v767
    %v933 = vpop.f32.mrb[0].mxu0
    %v934 = vadd.f32 0.0, %v933
    %v935 = vpop.f32.mrb[0].mxu0
    %936 = vmatprep.mubr.f32.mxu0 0.0
    %937 = vmatmul.mubr.f32.gmra.mrb[0].mxu0 %v770
    %v938 = vpop.f32.mrb[0].mxu0
    %v939 = vadd.f32 0.0, %v938
    %v940 = vpop.f32.mrb[0].mxu0
    %941 = vdwg.mxu0
    %vm942 = vcmp.lt.s32.totalorder %v41, 18
    %vm943 = vcmp.lt.s32.totalorder %v42, 18
    %vm944 = vcmp.lt.s32.totalorder %v43, 18
    %vm945 = vcmp.lt.s32.totalorder %v44, 18
    %v946 = vsel %vm942, 0.0, 1e+30
    %v947 = vsel %vm943, 0.0, 1e+30
    %v948 = vsel %vm944, 0.0, 1e+30
    %v949 = vsel %vm945, 0.0, 1e+30
    %v950 = vmul.f32 %v924, 0.125
    %v951 = vmul.f32 %v929, 0.125
    %v952 = vmul.f32 %v934, 0.125
    %v953 = vmul.f32 %v939, 0.125
    %v954 = vmul.f32 %v924, %v950
    %v955 = vmul.f32 %v929, %v951
    %v956 = vmul.f32 %v934, %v952
    %v957 = vmul.f32 %v939, %v953
    %v958 = vsub.f32 %v839, %v954
    %v959 = vsub.f32 %v844, %v955
    %v960 = vsub.f32 %v849, %v956
    %v961 = vsub.f32 %v854, %v957
    %v962 = vadd.f32 %v839, %v946
    %v963 = vadd.f32 %v844, %v947
    %v964 = vadd.f32 %v849, %v948
    %v965 = vadd.f32 %v854, %v949
    %s966 = sld [smem:[#allocation3 + $0x2]]
    %v967 = vstv %s966
    %v968 = vadd.f32 %v967, %v962
    %v969 = vadd.f32 %v967, %v963
    %v970 = vadd.f32 %v967, %v964
    %v971 = vadd.f32 %v967, %v965
    %v972 = vmul.f32 %v717, 2.0
    %v973 = vmul.f32 %v722, 2.0
    %v974 = vmul.f32 %v727, 2.0
    %v975 = vmul.f32 %v732, 2.0
    %v976 = vsub.f32 %v968, %v972
    %v977 = vsub.f32 %v969, %v973
    %v978 = vsub.f32 %v970, %v974
    %v979 = vsub.f32 %v971, %v975
    %v980 = vmax.f32 %v976, 0.0
    %v981 = vmax.f32 %v977, 0.0
    %v982 = vmax.f32 %v978, 0.0
    %v983 = vmax.f32 %v979, 0.0
    %s984 = scalar_lea.vmem %s4, 32
    %v985 = vld [vmem:[%s984] sm:$0xff]
    %v986 = vld [vmem:[%s984 + $0x8] sm:$0xff]
    %v987 = vld [vmem:[%s984 + $0x10] sm:$0xff]
    %v988 = vld [vmem:[%s984 + $0x18] sm:$0xff]
    %990 = vset.pattern.permute.xlu0 0
    %991 = vperm.xlu0 %990, %v985
    %v992 = vpop.permute.xlu0 %991
    %995 = vset.pattern.permute.xlu0 0
    %996 = vperm.xlu0 %995, %v986
    %v997 = vpop.permute.xlu0 %996
    %1000 = vset.pattern.permute.xlu0 0
    %1001 = vperm.xlu0 %1000, %v987
    %v1002 = vpop.permute.xlu0 %1001
    %1005 = vset.pattern.permute.xlu0 0
    %1006 = vperm.xlu0 %1005, %v988
    %v1007 = vpop.permute.xlu0 %1006
    %v1009 = vmul.f32 %v980, %v992
    %v1010 = vmul.f32 %v981, %v997
    %v1011 = vmul.f32 %v982, %v1002
    %v1012 = vmul.f32 %v983, %v1007
    %v1013 = vmin.f32 %v1009, %v1010
    %v1014 = vmin.f32 %v1011, %v1012
    %v1015 = vmin.f32 %v1013, %v1014
    %v1016 = vrot.slane %v1015, 4
    %v1017 = vmin.f32 %v1015, %v1016
    %v1018 = vrot.slane %v1017, 2
    %v1019 = vmin.f32 %v1017, %v1018
    %v1020 = vrot.slane %v1019, 1
    %v1021 = vmin.f32 %v1019, %v1020
    %v1022 = vmax.f32 %v1021, 0.0
    %1023 = vst [vmem:[#allocation2 + $0x1] sm:$0x1] %v1022
    %v1024 = vadd.f32 %v958, %v946
    %v1025 = vadd.f32 %v959, %v947
    %v1026 = vadd.f32 %v960, %v948
    %v1027 = vadd.f32 %v961, %v949
    %s1028 = sld [smem:[#allocation3 + $0x8]]
    %s1029 = sld [smem:[#allocation3 + $0x9]]
    %v1030 = vstv %s1029
    %v1031 = vmul.f32 %v1030, %v950
    %v1032 = vmul.f32 %v1030, %v951
    %v1033 = vmul.f32 %v1030, %v952
    %v1034 = vmul.f32 %v1030, %v953
    %v1035 = vsub.f32 %v737, %v1031
    %v1036 = vsub.f32 %v742, %v1032
    %v1037 = vsub.f32 %v747, %v1033
    %v1038 = vsub.f32 %v752, %v1034
    %v1039 = vstv %s1028
    %v1040 = vadd.f32 %v1039, %v1024
    %v1041 = vadd.f32 %v1039, %v1025
    %v1042 = vadd.f32 %v1039, %v1026
    %v1043 = vadd.f32 %v1039, %v1027
    %v1044 = vmul.f32 %v1035, 2.0
    %v1045 = vmul.f32 %v1036, 2.0
    %v1046 = vmul.f32 %v1037, 2.0
    %v1047 = vmul.f32 %v1038, 2.0
    %v1048 = vsub.f32 %v1040, %v1044
    %v1049 = vsub.f32 %v1041, %v1045
    %v1050 = vsub.f32 %v1042, %v1046
    %v1051 = vsub.f32 %v1043, %v1047
    %v1052 = vmax.f32 %v1048, 0.0
    %v1053 = vmax.f32 %v1049, 0.0
    %v1054 = vmax.f32 %v1050, 0.0
    %v1055 = vmax.f32 %v1051, 0.0
    %s1056 = scalar_lea.vmem %s4, 128
    %v1057 = vld [vmem:[%s1056] sm:$0xff]
    %v1058 = vld [vmem:[%s1056 + $0x8] sm:$0xff]
    %v1059 = vld [vmem:[%s1056 + $0x10] sm:$0xff]
    %v1060 = vld [vmem:[%s1056 + $0x18] sm:$0xff]
    %1062 = vset.pattern.permute.xlu0 0
    %1063 = vperm.xlu0 %1062, %v1057
    %v1064 = vpop.permute.xlu0 %1063
    %1067 = vset.pattern.permute.xlu0 0
    %1068 = vperm.xlu0 %1067, %v1058
    %v1069 = vpop.permute.xlu0 %1068
    %1072 = vset.pattern.permute.xlu0 0
    %1073 = vperm.xlu0 %1072, %v1059
    %v1074 = vpop.permute.xlu0 %1073
    %1077 = vset.pattern.permute.xlu0 0
    %1078 = vperm.xlu0 %1077, %v1060
    %v1079 = vpop.permute.xlu0 %1078
    %v1081 = vmul.f32 %v1052, %v1064
    %v1082 = vmul.f32 %v1053, %v1069
    %v1083 = vmul.f32 %v1054, %v1074
    %v1084 = vmul.f32 %v1055, %v1079
    %v1085 = vmin.f32 %v1081, %v1082
    %v1086 = vmin.f32 %v1083, %v1084
    %v1087 = vmin.f32 %v1085, %v1086
    %v1088 = vrot.slane %v1087, 4
    %v1089 = vmin.f32 %v1087, %v1088
    %v1090 = vrot.slane %v1089, 2
    %v1091 = vmin.f32 %v1089, %v1090
    %v1092 = vrot.slane %v1091, 1
    %v1093 = vmin.f32 %v1091, %v1092
    %v1094 = vmax.f32 %v1093, 0.0
    %1095 = vst [vmem:[#allocation2 + $0x4] sm:$0x1] %v1094
    %s1096 = scalar_lea.vmem %s1, 64
    %v1097 = vld [vmem:[%s1096] sm:$0xff]
    %v1098 = vld [vmem:[%s1096 + $0x8] sm:$0xff]
    %v1099 = vld [vmem:[%s1096 + $0x10] sm:$0xff]
    %v1100 = vld [vmem:[%s1096 + $0x18] sm:$0xff]
    %v1101 = vmul.f32 %v1097, %v1097
    %v1102 = vmul.f32 %v1098, %v1098
    %v1103 = vmul.f32 %v1099, %v1099
    %v1104 = vmul.f32 %v1100, %v1100
    %s1105 = scalar_lea.vmem %s2, 128
    %v1106 = vld [vmem:[%s1105] sm:$0xff]
    %v1107 = vld [vmem:[%s1105 + $0x8] sm:$0xff]
    %v1108 = vld [vmem:[%s1105 + $0x10] sm:$0xff]
    %v1109 = vld [vmem:[%s1105 + $0x18] sm:$0xff]
    %v1110 = vld [vmem:[%s1105 + $0x20] sm:$0xff]
    %v1111 = vld [vmem:[%s1105 + $0x28] sm:$0xff]
    %v1112 = vld [vmem:[%s1105 + $0x30] sm:$0xff]
    %v1113 = vld [vmem:[%s1105 + $0x38] sm:$0xff]
    %v1115 = vsel %vm61, %v1106, 0
    %v1118 = vsel %vm61, %v1107, 0
    %v1121 = vsel %vm61, %v1108, 0
    %v1124 = vsel %vm61, %v1109, 0
    %v1127 = vsel %vm61, %v1110, 0
    %v1130 = vsel %vm61, %v1111, 0
    %v1133 = vsel %vm61, %v1112, 0
    %v1136 = vsel %vm61, %v1113, 0
    %1138 = vmatprep.subr.mxu0 0.0
    %1139 = vmatpush1.msra.mxu0 %v1097
    %1140 = vmatprep.subr.mxu0 0.0
    %1141 = vmatpush1.msra.mxu0 %v1098
    %1142 = vmatprep.subr.mxu0 0.0
    %1143 = vmatpush1.msra.mxu0 %v1099
    %1144 = vmatprep.subr.mxu0 0.0
    %1145 = vmatpush1.msra.mxu0 %v1100
    %1146 = vmatprep.subr.mxu0 0.0
    %1147 = vmatpush1.msra.mxu0 0.0
    %1148 = vmatprep.subr.mxu0 0.0
    %1149 = vmatpush1.msra.mxu0 0.0
    %1150 = vmatprep.subr.mxu0 0.0
    %1151 = vmatpush1.msra.mxu0 0.0
    %1152 = vmatprep.subr.mxu0 0.0
    %1153 = vmatpush1.msra.mxu0 0.0
    %1154 = vmatprep.subr.mxu0 0.0
    %1155 = vmatpush1.msra.mxu0 0.0
    %1156 = vmatprep.subr.mxu0 0.0
    %1157 = vmatpush1.msra.mxu0 0.0
    %1158 = vmatprep.subr.mxu0 0.0
    %1159 = vmatpush1.msra.mxu0 0.0
    %1160 = vmatprep.subr.mxu0 0.0
    %1161 = vmatpush1.msra.mxu0 0.0
    %1162 = vmatprep.subr.mxu0 0.0
    %1163 = vmatpush1.msra.mxu0 0.0
    %1164 = vmatprep.subr.mxu0 0.0
    %1165 = vmatpush1.msra.mxu0 0.0
    %1166 = vmatprep.subr.mxu0 0.0
    %1167 = vmatpush1.msra.mxu0 0.0
    %1168 = vmatprep.subr.mxu0 0.0
    %1169 = vmatpush1.msra.mxu0 0.0
    %1170 = vmatprep.subr.mxu0 0.0
    %1171 = vmatpush1.msra.mxu0 0.0
    %1172 = vmatprep.subr.mxu0 0.0
    %1173 = vmatpush1.msra.mxu0 0.0
    %1174 = vmatprep.subr.mxu0 0.0
    %1175 = vmatpush1.msra.mxu0 0.0
    %1176 = vmatprep.subr.mxu0 0.0
    %1177 = vmatpush1.msra.mxu0 0.0
    %1178 = vmatprep.subr.mxu0 0.0
    %1179 = vmatpush1.msra.mxu0 0.0
    %1180 = vmatprep.subr.mxu0 0.0
    %1181 = vmatpush1.msra.mxu0 0.0
    %1182 = vmatprep.subr.mxu0 0.0
    %1183 = vmatpush1.msra.mxu0 0.0
    %1184 = vmatprep.subr.mxu0 0.0
    %1185 = vmatpush1.msra.mxu0 0.0
    %1186 = vmatprep.subr.mxu0 0.0
    %1187 = vmatpush1.msra.mxu0 0.0
    %1188 = vmatprep.subr.mxu0 0.0
    %1189 = vmatpush1.msra.mxu0 0.0
    %1190 = vmatprep.subr.mxu0 0.0
    %1191 = vmatpush1.msra.mxu0 0.0
    %1192 = vmatprep.subr.mxu0 0.0
    %1193 = vmatpush1.msra.mxu0 0.0
    %1194 = vmatprep.subr.mxu0 0.0
    %1195 = vmatpush1.msra.mxu0 0.0
    %1196 = vmatprep.subr.mxu0 0.0
    %1197 = vmatpush1.msra.mxu0 0.0
    %1198 = vmatprep.subr.mxu0 0.0
    %1199 = vmatpush1.msra.mxu0 0.0
    %1200 = vmatprep.subr.mxu0 0.0
    %1201 = vmatpush1.msra.mxu0 0.0
    %1202 = vmatprep.mubr.f32.mxu0 0.0
    %1203 = vmatmul.mubr.f32.gmra.mrb[0].mxu0 %v1115
    %v1204 = vpop.f32.mrb[0].mxu0
    %v1205 = vadd.f32 0.0, %v1204
    %v1206 = vpop.f32.mrb[0].mxu0
    %1207 = vmatprep.mubr.f32.mxu0 0.0
    %1208 = vmatmul.mubr.f32.gmra.mrb[0].mxu0 %v1118
    %v1209 = vpop.f32.mrb[0].mxu0
    %v1210 = vadd.f32 0.0, %v1209
    %v1211 = vpop.f32.mrb[0].mxu0
    %1212 = vmatprep.mubr.f32.mxu0 0.0
    %1213 = vmatmul.mubr.f32.gmra.mrb[0].mxu0 %v1121
    %v1214 = vpop.f32.mrb[0].mxu0
    %v1215 = vadd.f32 0.0, %v1214
    %v1216 = vpop.f32.mrb[0].mxu0
    %1217 = vmatprep.mubr.f32.mxu0 0.0
    %1218 = vmatmul.mubr.f32.gmra.mrb[0].mxu0 %v1124
    %v1219 = vpop.f32.mrb[0].mxu0
    %v1220 = vadd.f32 0.0, %v1219
    %v1221 = vpop.f32.mrb[0].mxu0
    %1222 = vmatprep.mubr.f32.mxu0 0.0
    %1223 = vmatmul.mubr.f32.gmra.mrb[0].mxu0 %v1127
    %v1224 = vpop.f32.mrb[0].mxu0
    %v1225 = vadd.f32 0.0, %v1224
    %v1226 = vpop.f32.mrb[0].mxu0
    %1227 = vmatprep.mubr.f32.mxu0 0.0
    %1228 = vmatmul.mubr.f32.gmra.mrb[0].mxu0 %v1130
    %v1229 = vpop.f32.mrb[0].mxu0
    %v1230 = vadd.f32 0.0, %v1229
    %v1231 = vpop.f32.mrb[0].mxu0
    %1232 = vmatprep.mubr.f32.mxu0 0.0
    %1233 = vmatmul.mubr.f32.gmra.mrb[0].mxu0 %v1133
    %v1234 = vpop.f32.mrb[0].mxu0
    %v1235 = vadd.f32 0.0, %v1234
    %v1236 = vpop.f32.mrb[0].mxu0
    %1237 = vmatprep.mubr.f32.mxu0 0.0
    %1238 = vmatmul.mubr.f32.gmra.mrb[0].mxu0 %v1136
    %v1239 = vpop.f32.mrb[0].mxu0
    %v1240 = vadd.f32 0.0, %v1239
    %v1241 = vpop.f32.mrb[0].mxu0
    %1242 = vdwg.mxu0
    %s1243 = scalar_lea.vmem %s3, 64
    %v1244 = vld [vmem:[%s1243] sm:$0xff]
    %v1245 = vld [vmem:[%s1243 + $0x8] sm:$0xff]
    %v1246 = vld [vmem:[%s1243 + $0x10] sm:$0xff]
    %v1247 = vld [vmem:[%s1243 + $0x18] sm:$0xff]
    %v1249 = vsel %vm61, %v1244, 0
    %v1252 = vsel %vm61, %v1245, 0
    %v1255 = vsel %vm61, %v1246, 0
    %v1258 = vsel %vm61, %v1247, 0
    %1260 = vmatprep.subr.mxu0 0.0
    %1261 = vmatpush1.msra.mxu0 %v1101
    %1262 = vmatprep.subr.mxu0 0.0
    %1263 = vmatpush1.msra.mxu0 %v1102
    %1264 = vmatprep.subr.mxu0 0.0
    %1265 = vmatpush1.msra.mxu0 %v1103
    %1266 = vmatprep.subr.mxu0 0.0
    %1267 = vmatpush1.msra.mxu0 %v1104
    %1268 = vmatprep.subr.mxu0 0.0
    %1269 = vmatpush1.msra.mxu0 0.0
    %1270 = vmatprep.subr.mxu0 0.0
    %1271 = vmatpush1.msra.mxu0 0.0
    %1272 = vmatprep.subr.mxu0 0.0
    %1273 = vmatpush1.msra.mxu0 0.0
    %1274 = vmatprep.subr.mxu0 0.0
    %1275 = vmatpush1.msra.mxu0 0.0
    %1276 = vmatprep.subr.mxu0 0.0
    %1277 = vmatpush1.msra.mxu0 0.0
    %1278 = vmatprep.subr.mxu0 0.0
    %1279 = vmatpush1.msra.mxu0 0.0
    %1280 = vmatprep.subr.mxu0 0.0
    %1281 = vmatpush1.msra.mxu0 0.0
    %1282 = vmatprep.subr.mxu0 0.0
    %1283 = vmatpush1.msra.mxu0 0.0
    %1284 = vmatprep.subr.mxu0 0.0
    %1285 = vmatpush1.msra.mxu0 0.0
    %1286 = vmatprep.subr.mxu0 0.0
    %1287 = vmatpush1.msra.mxu0 0.0
    %1288 = vmatprep.subr.mxu0 0.0
    %1289 = vmatpush1.msra.mxu0 0.0
    %1290 = vmatprep.subr.mxu0 0.0
    %1291 = vmatpush1.msra.mxu0 0.0
    %1292 = vmatprep.subr.mxu0 0.0
    %1293 = vmatpush1.msra.mxu0 0.0
    %1294 = vmatprep.subr.mxu0 0.0
    %1295 = vmatpush1.msra.mxu0 0.0
    %1296 = vmatprep.subr.mxu0 0.0
    %1297 = vmatpush1.msra.mxu0 0.0
    %1298 = vmatprep.subr.mxu0 0.0
    %1299 = vmatpush1.msra.mxu0 0.0
    %1300 = vmatprep.subr.mxu0 0.0
    %1301 = vmatpush1.msra.mxu0 0.0
    %1302 = vmatprep.subr.mxu0 0.0
    %1303 = vmatpush1.msra.mxu0 0.0
    %1304 = vmatprep.subr.mxu0 0.0
    %1305 = vmatpush1.msra.mxu0 0.0
    %1306 = vmatprep.subr.mxu0 0.0
    %1307 = vmatpush1.msra.mxu0 0.0
    %1308 = vmatprep.subr.mxu0 0.0
    %1309 = vmatpush1.msra.mxu0 0.0
    %1310 = vmatprep.subr.mxu0 0.0
    %1311 = vmatpush1.msra.mxu0 0.0
    %1312 = vmatprep.subr.mxu0 0.0
    %1313 = vmatpush1.msra.mxu0 0.0
    %1314 = vmatprep.subr.mxu0 0.0
    %1315 = vmatpush1.msra.mxu0 0.0
    %1316 = vmatprep.subr.mxu0 0.0
    %1317 = vmatpush1.msra.mxu0 0.0
    %1318 = vmatprep.subr.mxu0 0.0
    %1319 = vmatpush1.msra.mxu0 0.0
    %1320 = vmatprep.subr.mxu0 0.0
    %1321 = vmatpush1.msra.mxu0 0.0
    %1322 = vmatprep.subr.mxu0 0.0
    %1323 = vmatpush1.msra.mxu0 0.0
    %1324 = vmatprep.mubr.f32.mxu0 0.0
    %1325 = vmatmul.mubr.f32.gmra.mrb[0].mxu0 %v1249
    %v1326 = vpop.f32.mrb[0].mxu0
    %v1327 = vadd.f32 0.0, %v1326
    %v1328 = vpop.f32.mrb[0].mxu0
    %1329 = vmatprep.mubr.f32.mxu0 0.0
    %1330 = vmatmul.mubr.f32.gmra.mrb[0].mxu0 %v1252
    %v1331 = vpop.f32.mrb[0].mxu0
    %v1332 = vadd.f32 0.0, %v1331
    %v1333 = vpop.f32.mrb[0].mxu0
    %1334 = vmatprep.mubr.f32.mxu0 0.0
    %1335 = vmatmul.mubr.f32.gmra.mrb[0].mxu0 %v1255
    %v1336 = vpop.f32.mrb[0].mxu0
    %v1337 = vadd.f32 0.0, %v1336
    %v1338 = vpop.f32.mrb[0].mxu0
    %1339 = vmatprep.mubr.f32.mxu0 0.0
    %1340 = vmatmul.mubr.f32.gmra.mrb[0].mxu0 %v1258
    %v1341 = vpop.f32.mrb[0].mxu0
    %v1342 = vadd.f32 0.0, %v1341
    %v1343 = vpop.f32.mrb[0].mxu0
    %1344 = vdwg.mxu0
    %1345 = vmatprep.subr.mxu0 0.0
    %1346 = vmatpush1.msra.mxu0 %v1097
    %1347 = vmatprep.subr.mxu0 0.0
    %1348 = vmatpush1.msra.mxu0 %v1098
    %1349 = vmatprep.subr.mxu0 0.0
    %1350 = vmatpush1.msra.mxu0 %v1099
    %1351 = vmatprep.subr.mxu0 0.0
    %1352 = vmatpush1.msra.mxu0 %v1100
    %1353 = vmatprep.subr.mxu0 0.0
    %1354 = vmatpush1.msra.mxu0 0.0
    %1355 = vmatprep.subr.mxu0 0.0
    %1356 = vmatpush1.msra.mxu0 0.0
    %1357 = vmatprep.subr.mxu0 0.0
    %1358 = vmatpush1.msra.mxu0 0.0
    %1359 = vmatprep.subr.mxu0 0.0
    %1360 = vmatpush1.msra.mxu0 0.0
    %1361 = vmatprep.subr.mxu0 0.0
    %1362 = vmatpush1.msra.mxu0 0.0
    %1363 = vmatprep.subr.mxu0 0.0
    %1364 = vmatpush1.msra.mxu0 0.0
    %1365 = vmatprep.subr.mxu0 0.0
    %1366 = vmatpush1.msra.mxu0 0.0
    %1367 = vmatprep.subr.mxu0 0.0
    %1368 = vmatpush1.msra.mxu0 0.0
    %1369 = vmatprep.subr.mxu0 0.0
    %1370 = vmatpush1.msra.mxu0 0.0
    %1371 = vmatprep.subr.mxu0 0.0
    %1372 = vmatpush1.msra.mxu0 0.0
    %1373 = vmatprep.subr.mxu0 0.0
    %1374 = vmatpush1.msra.mxu0 0.0
    %1375 = vmatprep.subr.mxu0 0.0
    %1376 = vmatpush1.msra.mxu0 0.0
    %1377 = vmatprep.subr.mxu0 0.0
    %1378 = vmatpush1.msra.mxu0 0.0
    %1379 = vmatprep.subr.mxu0 0.0
    %1380 = vmatpush1.msra.mxu0 0.0
    %1381 = vmatprep.subr.mxu0 0.0
    %1382 = vmatpush1.msra.mxu0 0.0
    %1383 = vmatprep.subr.mxu0 0.0
    %1384 = vmatpush1.msra.mxu0 0.0
    %1385 = vmatprep.subr.mxu0 0.0
    %1386 = vmatpush1.msra.mxu0 0.0
    %1387 = vmatprep.subr.mxu0 0.0
    %1388 = vmatpush1.msra.mxu0 0.0
    %1389 = vmatprep.subr.mxu0 0.0
    %1390 = vmatpush1.msra.mxu0 0.0
    %1391 = vmatprep.subr.mxu0 0.0
    %1392 = vmatpush1.msra.mxu0 0.0
    %1393 = vmatprep.subr.mxu0 0.0
    %1394 = vmatpush1.msra.mxu0 0.0
    %1395 = vmatprep.subr.mxu0 0.0
    %1396 = vmatpush1.msra.mxu0 0.0
    %1397 = vmatprep.subr.mxu0 0.0
    %1398 = vmatpush1.msra.mxu0 0.0
    %1399 = vmatprep.subr.mxu0 0.0
    %1400 = vmatpush1.msra.mxu0 0.0
    %1401 = vmatprep.subr.mxu0 0.0
    %1402 = vmatpush1.msra.mxu0 0.0
    %1403 = vmatprep.subr.mxu0 0.0
    %1404 = vmatpush1.msra.mxu0 0.0
    %1405 = vmatprep.subr.mxu0 0.0
    %1406 = vmatpush1.msra.mxu0 0.0
    %1407 = vmatprep.subr.mxu0 0.0
    %1408 = vmatpush1.msra.mxu0 0.0
    %1409 = vmatprep.mubr.f32.mxu0 0.0
    %1410 = vmatmul.mubr.f32.gmra.mrb[0].mxu0 %v1249
    %v1411 = vpop.f32.mrb[0].mxu0
    %v1412 = vadd.f32 0.0, %v1411
    %v1413 = vpop.f32.mrb[0].mxu0
    %1414 = vmatprep.mubr.f32.mxu0 0.0
    %1415 = vmatmul.mubr.f32.gmra.mrb[0].mxu0 %v1252
    %v1416 = vpop.f32.mrb[0].mxu0
    %v1417 = vadd.f32 0.0, %v1416
    %v1418 = vpop.f32.mrb[0].mxu0
    %1419 = vmatprep.mubr.f32.mxu0 0.0
    %1420 = vmatmul.mubr.f32.gmra.mrb[0].mxu0 %v1255
    %v1421 = vpop.f32.mrb[0].mxu0
    %v1422 = vadd.f32 0.0, %v1421
    %v1423 = vpop.f32.mrb[0].mxu0
    %1424 = vmatprep.mubr.f32.mxu0 0.0
    %1425 = vmatmul.mubr.f32.gmra.mrb[0].mxu0 %v1258
    %v1426 = vpop.f32.mrb[0].mxu0
    %v1427 = vadd.f32 0.0, %v1426
    %v1428 = vpop.f32.mrb[0].mxu0
    %1429 = vdwg.mxu0
    %v1430 = vmul.f32 %v1412, 0.125
    %v1431 = vmul.f32 %v1417, 0.125
    %v1432 = vmul.f32 %v1422, 0.125
    %v1433 = vmul.f32 %v1427, 0.125
    %v1434 = vmul.f32 %v1412, %v1430
    %v1435 = vmul.f32 %v1417, %v1431
    %v1436 = vmul.f32 %v1422, %v1432
    %v1437 = vmul.f32 %v1427, %v1433
    %v1438 = vsub.f32 %v1327, %v1434
    %v1439 = vsub.f32 %v1332, %v1435
    %v1440 = vsub.f32 %v1337, %v1436
    %v1441 = vsub.f32 %v1342, %v1437
    %v1442 = vadd.f32 %v1327, %v381
    %v1443 = vadd.f32 %v1332, %v382
    %v1444 = vadd.f32 %v1337, %v383
    %v1445 = vadd.f32 %v1342, %v384
    %s1446 = sld [smem:[#allocation3 + $0xa]]
    %v1447 = vstv %s1446
    %v1448 = vadd.f32 %v1447, %v1442
    %v1449 = vadd.f32 %v1447, %v1443
    %v1450 = vadd.f32 %v1447, %v1444
    %v1451 = vadd.f32 %v1447, %v1445
    %v1452 = vmul.f32 %v1225, 2.0
    %v1453 = vmul.f32 %v1230, 2.0
    %v1454 = vmul.f32 %v1235, 2.0
    %v1455 = vmul.f32 %v1240, 2.0
    %v1456 = vsub.f32 %v1448, %v1452
    %v1457 = vsub.f32 %v1449, %v1453
    %v1458 = vsub.f32 %v1450, %v1454
    %v1459 = vsub.f32 %v1451, %v1455
    %v1460 = vmax.f32 %v1456, 0.0
    %v1461 = vmax.f32 %v1457, 0.0
    %v1462 = vmax.f32 %v1458, 0.0
    %v1463 = vmax.f32 %v1459, 0.0
    %s1464 = scalar_lea.vmem %s4, 160
    %v1465 = vld [vmem:[%s1464] sm:$0xff]
    %v1466 = vld [vmem:[%s1464 + $0x8] sm:$0xff]
    %v1467 = vld [vmem:[%s1464 + $0x10] sm:$0xff]
    %v1468 = vld [vmem:[%s1464 + $0x18] sm:$0xff]
    %1470 = vset.pattern.permute.xlu0 0
    %1471 = vperm.xlu0 %1470, %v1465
    %v1472 = vpop.permute.xlu0 %1471
    %1475 = vset.pattern.permute.xlu0 0
    %1476 = vperm.xlu0 %1475, %v1466
    %v1477 = vpop.permute.xlu0 %1476
    %1480 = vset.pattern.permute.xlu0 0
    %1481 = vperm.xlu0 %1480, %v1467
    %v1482 = vpop.permute.xlu0 %1481
    %1485 = vset.pattern.permute.xlu0 0
    %1486 = vperm.xlu0 %1485, %v1468
    %v1487 = vpop.permute.xlu0 %1486
    %v1489 = vmul.f32 %v1460, %v1472
    %v1490 = vmul.f32 %v1461, %v1477
    %v1491 = vmul.f32 %v1462, %v1482
    %v1492 = vmul.f32 %v1463, %v1487
    %v1493 = vmin.f32 %v1489, %v1490
    %v1494 = vmin.f32 %v1491, %v1492
    %v1495 = vmin.f32 %v1493, %v1494
    %v1496 = vrot.slane %v1495, 4
    %v1497 = vmin.f32 %v1495, %v1496
    %v1498 = vrot.slane %v1497, 2
    %v1499 = vmin.f32 %v1497, %v1498
    %v1500 = vrot.slane %v1499, 1
    %v1501 = vmin.f32 %v1499, %v1500
    %v1502 = vmax.f32 %v1501, 0.0
    %1503 = vst [vmem:[#allocation2 + $0x5] sm:$0x1] %v1502
    %v1504 = vadd.f32 %v1438, %v381
    %v1505 = vadd.f32 %v1439, %v382
    %v1506 = vadd.f32 %v1440, %v383
    %v1507 = vadd.f32 %v1441, %v384
    %s1508 = sld [smem:[#allocation3 + $0x4]]
    %s1509 = sld [smem:[#allocation3 + $0x5]]
    %v1510 = vstv %s1509
    %v1511 = vmul.f32 %v1510, %v1430
    %v1512 = vmul.f32 %v1510, %v1431
    %v1513 = vmul.f32 %v1510, %v1432
    %v1514 = vmul.f32 %v1510, %v1433
    %v1515 = vsub.f32 %v1205, %v1511
    %v1516 = vsub.f32 %v1210, %v1512
    %v1517 = vsub.f32 %v1215, %v1513
    %v1518 = vsub.f32 %v1220, %v1514
    %v1519 = vstv %s1508
    %v1520 = vadd.f32 %v1519, %v1504
    %v1521 = vadd.f32 %v1519, %v1505
    %v1522 = vadd.f32 %v1519, %v1506
    %v1523 = vadd.f32 %v1519, %v1507
    %v1524 = vmul.f32 %v1515, 2.0
    %v1525 = vmul.f32 %v1516, 2.0
    %v1526 = vmul.f32 %v1517, 2.0
    %v1527 = vmul.f32 %v1518, 2.0
    %v1528 = vsub.f32 %v1520, %v1524
    %v1529 = vsub.f32 %v1521, %v1525
    %v1530 = vsub.f32 %v1522, %v1526
    %v1531 = vsub.f32 %v1523, %v1527
    %v1532 = vmax.f32 %v1528, 0.0
    %v1533 = vmax.f32 %v1529, 0.0
    %v1534 = vmax.f32 %v1530, 0.0
    %v1535 = vmax.f32 %v1531, 0.0
    %s1536 = scalar_lea.vmem %s4, 64
    %v1537 = vld [vmem:[%s1536] sm:$0xff]
    %v1538 = vld [vmem:[%s1536 + $0x8] sm:$0xff]
    %v1539 = vld [vmem:[%s1536 + $0x10] sm:$0xff]
    %v1540 = vld [vmem:[%s1536 + $0x18] sm:$0xff]
    %1542 = vset.pattern.permute.xlu0 0
    %1543 = vperm.xlu0 %1542, %v1537
    %v1544 = vpop.permute.xlu0 %1543
    %1547 = vset.pattern.permute.xlu0 0
    %1548 = vperm.xlu0 %1547, %v1538
    %v1549 = vpop.permute.xlu0 %1548
    %1552 = vset.pattern.permute.xlu0 0
    %1553 = vperm.xlu0 %1552, %v1539
    %v1554 = vpop.permute.xlu0 %1553
    %1557 = vset.pattern.permute.xlu0 0
    %1558 = vperm.xlu0 %1557, %v1540
    %v1559 = vpop.permute.xlu0 %1558
    %v1561 = vmul.f32 %v1532, %v1544
    %v1562 = vmul.f32 %v1533, %v1549
    %v1563 = vmul.f32 %v1534, %v1554
    %v1564 = vmul.f32 %v1535, %v1559
    %v1565 = vmin.f32 %v1561, %v1562
    %v1566 = vmin.f32 %v1563, %v1564
    %v1567 = vmin.f32 %v1565, %v1566
    %v1568 = vrot.slane %v1567, 4
    %v1569 = vmin.f32 %v1567, %v1568
    %v1570 = vrot.slane %v1569, 2
    %v1571 = vmin.f32 %v1569, %v1570
    %v1572 = vrot.slane %v1571, 1
    %v1573 = vmin.f32 %v1571, %v1572
    %v1574 = vmax.f32 %v1573, 0.0
    %1575 = vst [vmem:[#allocation2 + $0x2] sm:$0x1] %v1574
    %v1576 = vld [vmem:[%s5] sm:$0x7]
    %v1577 = vld [vmem:[#allocation2] sm:$0x3f]
    %v1578 = vld [vmem:[%s6] sm:$0x7]
    %1580 = vset.pattern.permute.xlu0 0
    %1581 = vperm.xlu0 %1580, %v1578
    %v1582 = vpop.permute.xlu0 %1581
    %vm1584 = vcmask 48128
    %v1586 = vsel %vm1584, %v1576, 0
    %vm1588 = vcmask 1045504
    %v1590 = vsel %vm1588, %v1577, 0
    %1592 = vmatprep.subr.mxu0 0.0
    %1593 = vmatpush1.msra.mxu0 %v1590
    %1594 = vmatprep.subr.mxu0 0.0
    %1595 = vmatpush1.msra.mxu0 0.0
    %1596 = vmatprep.subr.mxu0 0.0
    %1597 = vmatpush1.msra.mxu0 0.0
    %1598 = vmatprep.subr.mxu0 0.0
    %1599 = vmatpush1.msra.mxu0 0.0
    %1600 = vmatprep.subr.mxu0 0.0
    %1601 = vmatpush1.msra.mxu0 0.0
    %1602 = vmatprep.subr.mxu0 0.0
    %1603 = vmatpush1.msra.mxu0 0.0
    %1604 = vmatprep.subr.mxu0 0.0
    %1605 = vmatpush1.msra.mxu0 0.0
    %1606 = vmatprep.subr.mxu0 0.0
    %1607 = vmatpush1.msra.mxu0 0.0
    %1608 = vmatprep.subr.mxu0 0.0
    %1609 = vmatpush1.msra.mxu0 0.0
    %1610 = vmatprep.subr.mxu0 0.0
    %1611 = vmatpush1.msra.mxu0 0.0
    %1612 = vmatprep.subr.mxu0 0.0
    %1613 = vmatpush1.msra.mxu0 0.0
    %1614 = vmatprep.subr.mxu0 0.0
    %1615 = vmatpush1.msra.mxu0 0.0
    %1616 = vmatprep.subr.mxu0 0.0
    %1617 = vmatpush1.msra.mxu0 0.0
    %1618 = vmatprep.subr.mxu0 0.0
    %1619 = vmatpush1.msra.mxu0 0.0
    %1620 = vmatprep.subr.mxu0 0.0
    %1621 = vmatpush1.msra.mxu0 0.0
    %1622 = vmatprep.subr.mxu0 0.0
    %1623 = vmatpush1.msra.mxu0 0.0
    %1624 = vmatprep.subr.mxu0 0.0
    %1625 = vmatpush1.msra.mxu0 0.0
    %1626 = vmatprep.subr.mxu0 0.0
    %1627 = vmatpush1.msra.mxu0 0.0
    %1628 = vmatprep.subr.mxu0 0.0
    %1629 = vmatpush1.msra.mxu0 0.0
    %1630 = vmatprep.subr.mxu0 0.0
    %1631 = vmatpush1.msra.mxu0 0.0
    %1632 = vmatprep.subr.mxu0 0.0
    %1633 = vmatpush1.msra.mxu0 0.0
    %1634 = vmatprep.subr.mxu0 0.0
    %1635 = vmatpush1.msra.mxu0 0.0
    %1636 = vmatprep.subr.mxu0 0.0
    %1637 = vmatpush1.msra.mxu0 0.0
    %1638 = vmatprep.subr.mxu0 0.0
    %1639 = vmatpush1.msra.mxu0 0.0
    %1640 = vmatprep.subr.mxu0 0.0
    %1641 = vmatpush1.msra.mxu0 0.0
    %1642 = vmatprep.subr.mxu0 0.0
    %1643 = vmatpush1.msra.mxu0 0.0
    %1644 = vmatprep.subr.mxu0 0.0
    %1645 = vmatpush1.msra.mxu0 0.0
    %1646 = vmatprep.subr.mxu0 0.0
    %1647 = vmatpush1.msra.mxu0 0.0
    %1648 = vmatprep.subr.mxu0 0.0
    %1649 = vmatpush1.msra.mxu0 0.0
    %1650 = vmatprep.subr.mxu0 0.0
    %1651 = vmatpush1.msra.mxu0 0.0
    %1652 = vmatprep.subr.mxu0 0.0
    %1653 = vmatpush1.msra.mxu0 0.0
    %1654 = vmatprep.subr.mxu0 0.0
    %1655 = vmatpush1.msra.mxu0 0.0
    %1656 = vmatprep.mubr.f32.mxu0 0.0
    %1657 = vmatmul.mubr.f32.gmra.mrb[0].mxu0 %v1586
    %v1658 = vpop.f32.mrb[0].mxu0
    %v1659 = vadd.f32 %v1582, %v1658
    %v1660 = vpop.f32.mrb[0].mxu0
    %1661 = vdwg.mxu0
    %1662 = vst [vmem:[#allocation6] sm:$0x7] %v1659
    // Predicated region
    $region34: #{tpu_custom_call.1} parent=1 // pred_check
      _
    $region35: #{tpu_custom_call.1} parent=1 // pred_check_branch
      %1664 = sbr.rel (0) target = $region37
    $region36: #{tpu_custom_call.1} parent=1 // pred_region
      %s1666 = ssub.s32 64, 64
      %1667 = vsyncadd [#allocation4], %s1666
      %s1669 = sshll.u32 [#allocation6], 4
      %s1670 = int_to_ptr.vmem [resolvable:$true] %s1669
      %1672 = dma.vmem_to_hbm [thread:$0]  %s1670, 64, %s7, [#allocation4]
    $region37: #{tpu_custom_call.1} parent=1 // pred_fallthru
      _
    // Predicated region
    $region38: #{tpu_custom_call.1} parent=1 // pred_check
      _
    $region39: #{tpu_custom_call.1} parent=1 // pred_check_branch
      %1674 = sbr.rel (0) target = $region41
    $region40: #{tpu_custom_call.1} parent=1 // pred_region
      %1675 = dma.done [#allocation4], 64
    $region41: #{tpu_custom_call.1} parent=1 // pred_fallthru
      _
    %1676 = vsyncpa [#allocation4], 1
    %1677 = vsyncpa [#allocation5], 1

</llo_original>
